<compile_context>
chip_gen: v5e
topology: v5e:2x2
jax: 0.10.0
libtpu: 0.0.40
codegen_flags: <defaults>
</compile_context>

<pallas_src>
import jax
import jax.numpy as jnp
from jax.experimental import pallas as pl
from jax.experimental.pallas import tpu as pltpu

# ----------------------------------------------------------------------------
# Network dimensions
# ----------------------------------------------------------------------------
N_BATCH = 2
C_IN = 4
H = 16
W = 16
C_OUT = 8
KH = KW = 3
HO, WO = H // 2, W // 2
F_IN = C_OUT * HO * WO          # 512
F_OUT = 32
F_PAD = 128                     # FC output padded to a full lane vector
LANES = W * C_OUT               # 128 : conv-output lane width (lane-dense)
KC = W * C_IN                   # 64  : per-tap contraction width


# ----------------------------------------------------------------------------
# Fused Pallas kernel: one batch sample per grid step
# ----------------------------------------------------------------------------
def _fused_forward_kernel(xpad_ref, wtap_ref, bconv_ref, w2_ref, blin_ref, o_ref):
    """
    xpad_ref : (1, H+2, (W+2)*C_IN) f32   zero-padded input, lanes = (w, c_in)
    wtap_ref : (9, W*C_IN, W*C_OUT) bf16  per-tap block-diagonal conv weights
    bconv_ref: (1, W*C_OUT)        f32    conv bias tiled over w
    w2_ref   : (H, W*C_OUT, F_PAD) bf16   Linear weights with AvgPool+Flatten folded in
    blin_ref : (1, F_PAD)          f32    linear bias (zero-padded to 128)
    o_ref    : (1, 1, F_PAD)       f32
    """
    xp = xpad_ref[0]                                         # (H+2, (W+2)*C_IN) f32

    # ---- Conv2d(3x3, pad=1), BN absorbed: 9 accumulated MXU matmuls ----------
    # acc[h, w*C_OUT+co] = sum_{kh,kw,ci} xpad[h+kh, (w+kw)*C_IN+ci] * Wc[co,ci,kh,kw]
    acc = jnp.zeros((H, LANES), jnp.float32)
    for kh in range(KH):
        for kw in range(KW):
            a_t = xp[kh:kh + H, kw * C_IN:kw * C_IN + KC]    # (H, W*C_IN) shifted view
            acc = acc + jnp.dot(a_t.astype(jnp.bfloat16),
                                wtap_ref[kh * KW + kw],
                                preferred_element_type=jnp.float32)
    y = jnp.maximum(acc + bconv_ref[...], 0.0)               # bias + ReLU, f32 epilogue

    # ---- AvgPool2d(2) + Flatten + Linear, pool/flatten folded into w2 --------
    # out[f] = sum_h sum_{wc} y[h, wc] * w2[h, wc, f]  (accumulate over image rows)
    out = blin_ref[...]                                      # (1, F_PAD) f32
    for h in range(H):
        out = out + jnp.dot(y[h:h + 1, :].astype(jnp.bfloat16), w2_ref[h],
                            preferred_element_type=jnp.float32)
    o_ref[0] = jnp.maximum(out, 0.0)                         # final ReLU


# ----------------------------------------------------------------------------
# Parse-time parameter rewrites (plain JAX, one-off; not on the forward path)
# ----------------------------------------------------------------------------
def absorb_batchnorm(weight, bias, gamma, beta, running_mean, running_var, eps=1e-5):
    """W_bar = gamma/std * W ; b_bar = gamma/std * (b - mu) + beta."""
    std = jnp.sqrt(running_var + eps)
    scale = gamma / std
    if weight.ndim == 4:              # Conv2d: (C_out, C_in, KH, KW)
        w_bar = weight * scale[:, None, None, None]
    else:                             # Linear: (out_features, in_features)
        w_bar = weight * scale[:, None]
    if bias is None:
        bias = jnp.zeros_like(running_mean)
    b_bar = (bias - running_mean) * scale + beta
    return w_bar, b_bar


def prepare_kernel_params(conv_w, conv_b, lin_w, lin_b):
    """Repack absorbed parameters into the layouts the fused kernel consumes."""
    # (a) Conv taps as block-diagonal (W*C_IN, W*C_OUT) matrices:
    #     wtap[t, w*C_IN+ci, v*C_OUT+co] = conv_w[co, ci, kh, kw] iff w == v.
    eye_w = jnp.eye(W, dtype=jnp.float32)
    taps = []
    for kh in range(KH):
        for kw in range(KW):
            base = conv_w[:, :, kh, kw].T                         # (C_IN, C_OUT)
            tap = jnp.einsum('wv,ic->wivc', eye_w, base)           # (W, C_IN, W, C_OUT)
            taps.append(tap.reshape(W * C_IN, W * C_OUT))
    wtap = jnp.stack(taps, axis=0).astype(jnp.bfloat16)            # (9, 64, 128)

    bconv = jnp.tile(conv_b, W).reshape(1, LANES).astype(jnp.float32)   # (1, 128)

    # (b) Fold AvgPool2d(2) + Flatten (torch NCHW order) into the Linear weight:
    #     W2[h, w*C_OUT+co, f] = lin_w[f, co*HO*WO + (h//2)*WO + (w//2)] / 4
    lin_w4 = (lin_w * 0.25).reshape(F_OUT, C_OUT, HO, WO)
    h_idx = jnp.arange(H) // 2
    w_idx = jnp.arange(W) // 2
    w2 = lin_w4[:, :, h_idx[:, None], w_idx[None, :]]              # (F_OUT, C_OUT, H, W)
    w2 = w2.transpose(2, 3, 1, 0).reshape(H, LANES, F_OUT)         # (H, 128, F_OUT)
    w2 = jnp.pad(w2, ((0, 0), (0, 0), (0, F_PAD - F_OUT))).astype(jnp.bfloat16)

    blin = jnp.pad(lin_b, (0, F_PAD - F_OUT)).reshape(1, F_PAD).astype(jnp.float32)
    return {"wtap": wtap, "bconv": bconv, "w2": w2, "blin": blin}


# ----------------------------------------------------------------------------
# Forward pass: one fused pallas_call
# ----------------------------------------------------------------------------
@jax.jit
def parsed_network_forward(x, kparams):
    n = x.shape[0]
    # Minimal input formatting (a few KB): NCHW -> NHWC, spatial zero-pad, fold
    # (w, c_in) into the lane axis. All patch/tap extraction happens in-kernel.
    xp = jnp.transpose(x, (0, 2, 3, 1))
    xp = jnp.pad(xp, ((0, 0), (1, 1), (1, 1), (0, 0)))
    xp = xp.reshape(n, H + 2, (W + 2) * C_IN).astype(jnp.float32)

    out = pl.pallas_call(
        _fused_forward_kernel,
        out_shape=jax.ShapeDtypeStruct((n, 1, F_PAD), jnp.float32),
        grid=(n,),
        in_specs=[
            pl.BlockSpec((1, H + 2, (W + 2) * C_IN), lambda i: (i, 0, 0)),
            pl.BlockSpec((KH * KW, KC, LANES), lambda i: (0, 0, 0)),
            pl.BlockSpec((1, LANES), lambda i: (0, 0)),
            pl.BlockSpec((H, LANES, F_PAD), lambda i: (0, 0, 0)),
            pl.BlockSpec((1, F_PAD), lambda i: (0, 0)),
        ],
        out_specs=pl.BlockSpec((1, 1, F_PAD), lambda i: (i, 0, 0)),
        compiler_params=pltpu.CompilerParams(
            dimension_semantics=("parallel",),      # batch shards across v7x TCs
            vmem_limit_bytes=32 * 1024 * 1024),
    )(xp, kparams["wtap"], kparams["bconv"], kparams["w2"], kparams["blin"])
    return out.reshape(n, F_PAD)[:, :F_OUT]


# ----------------------------------------------------------------------------
# Pure-JAX reference (f32) for correctness check
# ----------------------------------------------------------------------------
def reference_forward(x, params):
    conv_w, conv_b = params["conv_w"], params["conv_b"]
    y = jax.lax.conv_general_dilated(
        x, conv_w, window_strides=(1, 1), padding=((1, 1), (1, 1)),
        dimension_numbers=("NCHW", "OIHW", "NCHW"))
    y = jnp.maximum(y + conv_b[None, :, None, None], 0.0)
    n, c, h, w = y.shape
    p = y.reshape(n, c, h // 2, 2, w // 2, 2).mean(axis=(3, 5))
    flat = p.reshape(n, -1)
    out = flat @ params["lin_w"].T + params["lin_b"]
    return jnp.maximum(out, 0.0)


# ----------------------------------------------------------------------------
# Main
# ----------------------------------------------------------------------------
if __name__ == "__main__":
    key = jax.random.PRNGKey(0)
    keys = jax.random.split(key, 12)

    # Original (pre-parse) parameters, deterministic.
    conv_w0 = 0.1 * jax.random.normal(keys[0], (C_OUT, C_IN, 3, 3), jnp.float32)
    conv_b0 = 0.1 * jax.random.normal(keys[1], (C_OUT,), jnp.float32)
    bn2_gamma = 1.0 + 0.1 * jax.random.normal(keys[2], (C_OUT,), jnp.float32)
    bn2_beta = 0.1 * jax.random.normal(keys[3], (C_OUT,), jnp.float32)
    bn2_mean = 0.1 * jax.random.normal(keys[4], (C_OUT,), jnp.float32)
    bn2_var = 0.5 + jax.random.uniform(keys[5], (C_OUT,), jnp.float32)

    lin_w0 = 0.05 * jax.random.normal(keys[6], (F_OUT, F_IN), jnp.float32)
    lin_b0 = 0.1 * jax.random.normal(keys[7], (F_OUT,), jnp.float32)
    bn1_gamma = 1.0 + 0.1 * jax.random.normal(keys[8], (F_OUT,), jnp.float32)
    bn1_beta = 0.1 * jax.random.normal(keys[9], (F_OUT,), jnp.float32)
    bn1_mean = 0.1 * jax.random.normal(keys[10], (F_OUT,), jnp.float32)
    bn1_var = 0.5 + jax.random.uniform(keys[11], (F_OUT,), jnp.float32)

    # parse(): absorb BatchNorm into the preceding parametric modules, then fold
    # AvgPool+Flatten into the Linear weights and repack for the fused kernel.
    conv_w, conv_b = absorb_batchnorm(conv_w0, conv_b0, bn2_gamma, bn2_beta,
                                      bn2_mean, bn2_var)
    lin_w, lin_b = absorb_batchnorm(lin_w0, lin_b0, bn1_gamma, bn1_beta,
                                    bn1_mean, bn1_var)
    kparams = prepare_kernel_params(conv_w, conv_b, lin_w, lin_b)

    # TODO(synk): normalize_model() (data-driven weight rescaling) is a parse-time
    # calibration pass, not part of forward(); it is not reproduced here.

    x = jax.random.normal(jax.random.PRNGKey(42), (N_BATCH, C_IN, H, W), jnp.float32)

    out = parsed_network_forward(x, kparams)
    out = jax.block_until_ready(out)

    ref = reference_forward(x, {"conv_w": conv_w, "conv_b": conv_b,
                                "lin_w": lin_w, "lin_b": lin_b})
    assert out.shape == (N_BATCH, F_OUT)
    max_err = jnp.max(jnp.abs(out - ref))
    # bf16 matmul operands (f32 accumulation) -> relaxed tolerance vs the f32 reference.
    assert jnp.allclose(out, ref, atol=3e-2, rtol=3e-2), f"max abs err {max_err}"

    print("KERNEL_OK")
</pallas_src>

<mosaic_0001>
module attributes {stable_mosaic.version = 11 : i64} {
  func.func @_fused_forward_kernel(%arg0: i32, %arg1: memref<1x18x72xf32, #tpu.memory_space<vmem>>, %arg2: memref<9x64x128xbf16, #tpu.memory_space<vmem>>, %arg3: memref<1x128xf32, #tpu.memory_space<vmem>>, %arg4: memref<16x128x128xbf16, #tpu.memory_space<vmem>>, %arg5: memref<1x128xf32, #tpu.memory_space<vmem>>, %arg6: memref<1x1x128xf32, #tpu.memory_space<vmem>>) attributes {dimension_semantics = [#tpu.dimension_semantics<parallel>], iteration_bounds = array<i64: 2>, scalar_prefetch = 0 : i64, scratch_operands = 0 : i64, tpu.core_type = #tpu.core_type<tc>, window_params = [{transform_indices = @transform_0, window_bounds = array<i64: 1, 18, 72>}, {pipeline_mode = #tpu.pipeline_mode<synchronous>, transform_indices = @transform_1, window_bounds = array<i64: 9, 64, 128>}, {pipeline_mode = #tpu.pipeline_mode<synchronous>, transform_indices = @transform_2, window_bounds = array<i64: 1, 128>}, {pipeline_mode = #tpu.pipeline_mode<synchronous>, transform_indices = @transform_3, window_bounds = array<i64: 16, 128, 128>}, {pipeline_mode = #tpu.pipeline_mode<synchronous>, transform_indices = @transform_4, window_bounds = array<i64: 1, 128>}, {transform_indices = @transform_5, window_bounds = array<i64: 1, 1, 128>}]} {
    %c0 = arith.constant 0 : index
    %c0_0 = arith.constant 0 : index
    %c0_1 = arith.constant 0 : index
    %0 = vector.load %arg1[%c0, %c0_0, %c0_1] : memref<1x18x72xf32, #tpu.memory_space<vmem>>, vector<1x18x72xf32>
    %1 = vector.shape_cast %0 : vector<1x18x72xf32> to vector<18x72xf32>
    %cst = arith.constant 0.000000e+00 : f32
    %2 = vector.broadcast %cst : f32 to vector<16x128xf32>
    %3 = vector.extract_strided_slice %1 {offsets = [0, 0], sizes = [16, 64], strides = [1, 1]} : vector<18x72xf32> to vector<16x64xf32>
    %4 = arith.truncf %3 : vector<16x64xf32> to vector<16x64xbf16>
    %c0_2 = arith.constant 0 : index
    %c0_3 = arith.constant 0 : index
    %c0_4 = arith.constant 0 : index
    %5 = vector.load %arg2[%c0_2, %c0_3, %c0_4] : memref<9x64x128xbf16, #tpu.memory_space<vmem>>, vector<1x64x128xbf16>
    %6 = vector.shape_cast %5 : vector<1x64x128xbf16> to vector<64x128xbf16>
    %cst_5 = arith.constant dense<0.000000e+00> : vector<16x128xf32>
    %7 = tpu.matmul %4, %6, %cst_5 {dimension_numbers = #tpu.dot_dimension_numbers<[1], [0], [0], [1], [0, 0, 1, 1], [], []>} : vector<16x64xbf16>, vector<64x128xbf16>, vector<16x128xf32> -> vector<16x128xf32>
    %8 = arith.addf %2, %7 : vector<16x128xf32>
    %9 = vector.extract_strided_slice %1 {offsets = [0, 4], sizes = [16, 64], strides = [1, 1]} : vector<18x72xf32> to vector<16x64xf32>
    %10 = arith.truncf %9 : vector<16x64xf32> to vector<16x64xbf16>
    %c1 = arith.constant 1 : index
    %c0_6 = arith.constant 0 : index
    %c0_7 = arith.constant 0 : index
    %11 = vector.load %arg2[%c1, %c0_6, %c0_7] : memref<9x64x128xbf16, #tpu.memory_space<vmem>>, vector<1x64x128xbf16>
    %12 = vector.shape_cast %11 : vector<1x64x128xbf16> to vector<64x128xbf16>
    %cst_8 = arith.constant dense<0.000000e+00> : vector<16x128xf32>
    %13 = tpu.matmul %10, %12, %cst_8 {dimension_numbers = #tpu.dot_dimension_numbers<[1], [0], [0], [1], [0, 0, 1, 1], [], []>} : vector<16x64xbf16>, vector<64x128xbf16>, vector<16x128xf32> -> vector<16x128xf32>
    %14 = arith.addf %8, %13 : vector<16x128xf32>
    %15 = vector.extract_strided_slice %1 {offsets = [0, 8], sizes = [16, 64], strides = [1, 1]} : vector<18x72xf32> to vector<16x64xf32>
    %16 = arith.truncf %15 : vector<16x64xf32> to vector<16x64xbf16>
    %c2 = arith.constant 2 : index
    %c0_9 = arith.constant 0 : index
    %c0_10 = arith.constant 0 : index
    %17 = vector.load %arg2[%c2, %c0_9, %c0_10] : memref<9x64x128xbf16, #tpu.memory_space<vmem>>, vector<1x64x128xbf16>
    %18 = vector.shape_cast %17 : vector<1x64x128xbf16> to vector<64x128xbf16>
    %cst_11 = arith.constant dense<0.000000e+00> : vector<16x128xf32>
    %19 = tpu.matmul %16, %18, %cst_11 {dimension_numbers = #tpu.dot_dimension_numbers<[1], [0], [0], [1], [0, 0, 1, 1], [], []>} : vector<16x64xbf16>, vector<64x128xbf16>, vector<16x128xf32> -> vector<16x128xf32>
    %20 = arith.addf %14, %19 : vector<16x128xf32>
    %21 = vector.extract_strided_slice %1 {offsets = [1, 0], sizes = [16, 64], strides = [1, 1]} : vector<18x72xf32> to vector<16x64xf32>
    %22 = arith.truncf %21 : vector<16x64xf32> to vector<16x64xbf16>
    %c3 = arith.constant 3 : index
    %c0_12 = arith.constant 0 : index
    %c0_13 = arith.constant 0 : index
    %23 = vector.load %arg2[%c3, %c0_12, %c0_13] : memref<9x64x128xbf16, #tpu.memory_space<vmem>>, vector<1x64x128xbf16>
    %24 = vector.shape_cast %23 : vector<1x64x128xbf16> to vector<64x128xbf16>
    %cst_14 = arith.constant dense<0.000000e+00> : vector<16x128xf32>
    %25 = tpu.matmul %22, %24, %cst_14 {dimension_numbers = #tpu.dot_dimension_numbers<[1], [0], [0], [1], [0, 0, 1, 1], [], []>} : vector<16x64xbf16>, vector<64x128xbf16>, vector<16x128xf32> -> vector<16x128xf32>
    %26 = arith.addf %20, %25 : vector<16x128xf32>
    %27 = vector.extract_strided_slice %1 {offsets = [1, 4], sizes = [16, 64], strides = [1, 1]} : vector<18x72xf32> to vector<16x64xf32>
    %28 = arith.truncf %27 : vector<16x64xf32> to vector<16x64xbf16>
    %c4 = arith.constant 4 : index
    %c0_15 = arith.constant 0 : index
    %c0_16 = arith.constant 0 : index
    %29 = vector.load %arg2[%c4, %c0_15, %c0_16] : memref<9x64x128xbf16, #tpu.memory_space<vmem>>, vector<1x64x128xbf16>
    %30 = vector.shape_cast %29 : vector<1x64x128xbf16> to vector<64x128xbf16>
    %cst_17 = arith.constant dense<0.000000e+00> : vector<16x128xf32>
    %31 = tpu.matmul %28, %30, %cst_17 {dimension_numbers = #tpu.dot_dimension_numbers<[1], [0], [0], [1], [0, 0, 1, 1], [], []>} : vector<16x64xbf16>, vector<64x128xbf16>, vector<16x128xf32> -> vector<16x128xf32>
    %32 = arith.addf %26, %31 : vector<16x128xf32>
    %33 = vector.extract_strided_slice %1 {offsets = [1, 8], sizes = [16, 64], strides = [1, 1]} : vector<18x72xf32> to vector<16x64xf32>
    %34 = arith.truncf %33 : vector<16x64xf32> to vector<16x64xbf16>
    %c5 = arith.constant 5 : index
    %c0_18 = arith.constant 0 : index
    %c0_19 = arith.constant 0 : index
    %35 = vector.load %arg2[%c5, %c0_18, %c0_19] : memref<9x64x128xbf16, #tpu.memory_space<vmem>>, vector<1x64x128xbf16>
    %36 = vector.shape_cast %35 : vector<1x64x128xbf16> to vector<64x128xbf16>
    %cst_20 = arith.constant dense<0.000000e+00> : vector<16x128xf32>
    %37 = tpu.matmul %34, %36, %cst_20 {dimension_numbers = #tpu.dot_dimension_numbers<[1], [0], [0], [1], [0, 0, 1, 1], [], []>} : vector<16x64xbf16>, vector<64x128xbf16>, vector<16x128xf32> -> vector<16x128xf32>
    %38 = arith.addf %32, %37 : vector<16x128xf32>
    %39 = vector.extract_strided_slice %1 {offsets = [2, 0], sizes = [16, 64], strides = [1, 1]} : vector<18x72xf32> to vector<16x64xf32>
    %40 = arith.truncf %39 : vector<16x64xf32> to vector<16x64xbf16>
    %c6 = arith.constant 6 : index
    %c0_21 = arith.constant 0 : index
    %c0_22 = arith.constant 0 : index
    %41 = vector.load %arg2[%c6, %c0_21, %c0_22] : memref<9x64x128xbf16, #tpu.memory_space<vmem>>, vector<1x64x128xbf16>
    %42 = vector.shape_cast %41 : vector<1x64x128xbf16> to vector<64x128xbf16>
    %cst_23 = arith.constant dense<0.000000e+00> : vector<16x128xf32>
    %43 = tpu.matmul %40, %42, %cst_23 {dimension_numbers = #tpu.dot_dimension_numbers<[1], [0], [0], [1], [0, 0, 1, 1], [], []>} : vector<16x64xbf16>, vector<64x128xbf16>, vector<16x128xf32> -> vector<16x128xf32>
    %44 = arith.addf %38, %43 : vector<16x128xf32>
    %45 = vector.extract_strided_slice %1 {offsets = [2, 4], sizes = [16, 64], strides = [1, 1]} : vector<18x72xf32> to vector<16x64xf32>
    %46 = arith.truncf %45 : vector<16x64xf32> to vector<16x64xbf16>
    %c7 = arith.constant 7 : index
    %c0_24 = arith.constant 0 : index
    %c0_25 = arith.constant 0 : index
    %47 = vector.load %arg2[%c7, %c0_24, %c0_25] : memref<9x64x128xbf16, #tpu.memory_space<vmem>>, vector<1x64x128xbf16>
    %48 = vector.shape_cast %47 : vector<1x64x128xbf16> to vector<64x128xbf16>
    %cst_26 = arith.constant dense<0.000000e+00> : vector<16x128xf32>
    %49 = tpu.matmul %46, %48, %cst_26 {dimension_numbers = #tpu.dot_dimension_numbers<[1], [0], [0], [1], [0, 0, 1, 1], [], []>} : vector<16x64xbf16>, vector<64x128xbf16>, vector<16x128xf32> -> vector<16x128xf32>
    %50 = arith.addf %44, %49 : vector<16x128xf32>
    %51 = vector.extract_strided_slice %1 {offsets = [2, 8], sizes = [16, 64], strides = [1, 1]} : vector<18x72xf32> to vector<16x64xf32>
    %52 = arith.truncf %51 : vector<16x64xf32> to vector<16x64xbf16>
    %c8 = arith.constant 8 : index
    %c0_27 = arith.constant 0 : index
    %c0_28 = arith.constant 0 : index
    %53 = vector.load %arg2[%c8, %c0_27, %c0_28] : memref<9x64x128xbf16, #tpu.memory_space<vmem>>, vector<1x64x128xbf16>
    %54 = vector.shape_cast %53 : vector<1x64x128xbf16> to vector<64x128xbf16>
    %cst_29 = arith.constant dense<0.000000e+00> : vector<16x128xf32>
    %55 = tpu.matmul %52, %54, %cst_29 {dimension_numbers = #tpu.dot_dimension_numbers<[1], [0], [0], [1], [0, 0, 1, 1], [], []>} : vector<16x64xbf16>, vector<64x128xbf16>, vector<16x128xf32> -> vector<16x128xf32>
    %56 = arith.addf %50, %55 : vector<16x128xf32>
    %c0_30 = arith.constant 0 : index
    %c0_31 = arith.constant 0 : index
    %57 = vector.load %arg3[%c0_30, %c0_31] : memref<1x128xf32, #tpu.memory_space<vmem>>, vector<1x128xf32>
    %58 = vector.broadcast %57 : vector<1x128xf32> to vector<16x128xf32>
    %59 = arith.addf %56, %58 : vector<16x128xf32>
    %cst_32 = arith.constant 0.000000e+00 : f32
    %60 = vector.broadcast %cst_32 : f32 to vector<16x128xf32>
    %61 = arith.maximumf %59, %60 : vector<16x128xf32>
    %c0_33 = arith.constant 0 : index
    %c0_34 = arith.constant 0 : index
    %62 = vector.load %arg5[%c0_33, %c0_34] : memref<1x128xf32, #tpu.memory_space<vmem>>, vector<1x128xf32>
    %63 = vector.extract_strided_slice %61 {offsets = [0, 0], sizes = [1, 128], strides = [1, 1]} : vector<16x128xf32> to vector<1x128xf32>
    %64 = arith.truncf %63 : vector<1x128xf32> to vector<1x128xbf16>
    %c0_35 = arith.constant 0 : index
    %c0_36 = arith.constant 0 : index
    %c0_37 = arith.constant 0 : index
    %65 = vector.load %arg4[%c0_35, %c0_36, %c0_37] : memref<16x128x128xbf16, #tpu.memory_space<vmem>>, vector<1x128x128xbf16>
    %66 = vector.shape_cast %65 : vector<1x128x128xbf16> to vector<128x128xbf16>
    %cst_38 = arith.constant dense<0.000000e+00> : vector<1x128xf32>
    %67 = tpu.matmul %64, %66, %cst_38 {dimension_numbers = #tpu.dot_dimension_numbers<[1], [0], [0], [1], [0, 0, 1, 1], [], []>} : vector<1x128xbf16>, vector<128x128xbf16>, vector<1x128xf32> -> vector<1x128xf32>
    %68 = arith.addf %62, %67 : vector<1x128xf32>
    %69 = vector.extract_strided_slice %61 {offsets = [1, 0], sizes = [1, 128], strides = [1, 1]} : vector<16x128xf32> to vector<1x128xf32>
    %70 = arith.truncf %69 : vector<1x128xf32> to vector<1x128xbf16>
    %c1_39 = arith.constant 1 : index
    %c0_40 = arith.constant 0 : index
    %c0_41 = arith.constant 0 : index
    %71 = vector.load %arg4[%c1_39, %c0_40, %c0_41] : memref<16x128x128xbf16, #tpu.memory_space<vmem>>, vector<1x128x128xbf16>
    %72 = vector.shape_cast %71 : vector<1x128x128xbf16> to vector<128x128xbf16>
    %cst_42 = arith.constant dense<0.000000e+00> : vector<1x128xf32>
    %73 = tpu.matmul %70, %72, %cst_42 {dimension_numbers = #tpu.dot_dimension_numbers<[1], [0], [0], [1], [0, 0, 1, 1], [], []>} : vector<1x128xbf16>, vector<128x128xbf16>, vector<1x128xf32> -> vector<1x128xf32>
    %74 = arith.addf %68, %73 : vector<1x128xf32>
    %75 = vector.extract_strided_slice %61 {offsets = [2, 0], sizes = [1, 128], strides = [1, 1]} : vector<16x128xf32> to vector<1x128xf32>
    %76 = arith.truncf %75 : vector<1x128xf32> to vector<1x128xbf16>
    %c2_43 = arith.constant 2 : index
    %c0_44 = arith.constant 0 : index
    %c0_45 = arith.constant 0 : index
    %77 = vector.load %arg4[%c2_43, %c0_44, %c0_45] : memref<16x128x128xbf16, #tpu.memory_space<vmem>>, vector<1x128x128xbf16>
    %78 = vector.shape_cast %77 : vector<1x128x128xbf16> to vector<128x128xbf16>
    %cst_46 = arith.constant dense<0.000000e+00> : vector<1x128xf32>
    %79 = tpu.matmul %76, %78, %cst_46 {dimension_numbers = #tpu.dot_dimension_numbers<[1], [0], [0], [1], [0, 0, 1, 1], [], []>} : vector<1x128xbf16>, vector<128x128xbf16>, vector<1x128xf32> -> vector<1x128xf32>
    %80 = arith.addf %74, %79 : vector<1x128xf32>
    %81 = vector.extract_strided_slice %61 {offsets = [3, 0], sizes = [1, 128], strides = [1, 1]} : vector<16x128xf32> to vector<1x128xf32>
    %82 = arith.truncf %81 : vector<1x128xf32> to vector<1x128xbf16>
    %c3_47 = arith.constant 3 : index
    %c0_48 = arith.constant 0 : index
    %c0_49 = arith.constant 0 : index
    %83 = vector.load %arg4[%c3_47, %c0_48, %c0_49] : memref<16x128x128xbf16, #tpu.memory_space<vmem>>, vector<1x128x128xbf16>
    %84 = vector.shape_cast %83 : vector<1x128x128xbf16> to vector<128x128xbf16>
    %cst_50 = arith.constant dense<0.000000e+00> : vector<1x128xf32>
    %85 = tpu.matmul %82, %84, %cst_50 {dimension_numbers = #tpu.dot_dimension_numbers<[1], [0], [0], [1], [0, 0, 1, 1], [], []>} : vector<1x128xbf16>, vector<128x128xbf16>, vector<1x128xf32> -> vector<1x128xf32>
    %86 = arith.addf %80, %85 : vector<1x128xf32>
    %87 = vector.extract_strided_slice %61 {offsets = [4, 0], sizes = [1, 128], strides = [1, 1]} : vector<16x128xf32> to vector<1x128xf32>
    %88 = arith.truncf %87 : vector<1x128xf32> to vector<1x128xbf16>
    %c4_51 = arith.constant 4 : index
    %c0_52 = arith.constant 0 : index
    %c0_53 = arith.constant 0 : index
    %89 = vector.load %arg4[%c4_51, %c0_52, %c0_53] : memref<16x128x128xbf16, #tpu.memory_space<vmem>>, vector<1x128x128xbf16>
    %90 = vector.shape_cast %89 : vector<1x128x128xbf16> to vector<128x128xbf16>
    %cst_54 = arith.constant dense<0.000000e+00> : vector<1x128xf32>
    %91 = tpu.matmul %88, %90, %cst_54 {dimension_numbers = #tpu.dot_dimension_numbers<[1], [0], [0], [1], [0, 0, 1, 1], [], []>} : vector<1x128xbf16>, vector<128x128xbf16>, vector<1x128xf32> -> vector<1x128xf32>
    %92 = arith.addf %86, %91 : vector<1x128xf32>
    %93 = vector.extract_strided_slice %61 {offsets = [5, 0], sizes = [1, 128], strides = [1, 1]} : vector<16x128xf32> to vector<1x128xf32>
    %94 = arith.truncf %93 : vector<1x128xf32> to vector<1x128xbf16>
    %c5_55 = arith.constant 5 : index
    %c0_56 = arith.constant 0 : index
    %c0_57 = arith.constant 0 : index
    %95 = vector.load %arg4[%c5_55, %c0_56, %c0_57] : memref<16x128x128xbf16, #tpu.memory_space<vmem>>, vector<1x128x128xbf16>
    %96 = vector.shape_cast %95 : vector<1x128x128xbf16> to vector<128x128xbf16>
    %cst_58 = arith.constant dense<0.000000e+00> : vector<1x128xf32>
    %97 = tpu.matmul %94, %96, %cst_58 {dimension_numbers = #tpu.dot_dimension_numbers<[1], [0], [0], [1], [0, 0, 1, 1], [], []>} : vector<1x128xbf16>, vector<128x128xbf16>, vector<1x128xf32> -> vector<1x128xf32>
    %98 = arith.addf %92, %97 : vector<1x128xf32>
    %99 = vector.extract_strided_slice %61 {offsets = [6, 0], sizes = [1, 128], strides = [1, 1]} : vector<16x128xf32> to vector<1x128xf32>
    %100 = arith.truncf %99 : vector<1x128xf32> to vector<1x128xbf16>
    %c6_59 = arith.constant 6 : index
    %c0_60 = arith.constant 0 : index
    %c0_61 = arith.constant 0 : index
    %101 = vector.load %arg4[%c6_59, %c0_60, %c0_61] : memref<16x128x128xbf16, #tpu.memory_space<vmem>>, vector<1x128x128xbf16>
    %102 = vector.shape_cast %101 : vector<1x128x128xbf16> to vector<128x128xbf16>
    %cst_62 = arith.constant dense<0.000000e+00> : vector<1x128xf32>
    %103 = tpu.matmul %100, %102, %cst_62 {dimension_numbers = #tpu.dot_dimension_numbers<[1], [0], [0], [1], [0, 0, 1, 1], [], []>} : vector<1x128xbf16>, vector<128x128xbf16>, vector<1x128xf32> -> vector<1x128xf32>
    %104 = arith.addf %98, %103 : vector<1x128xf32>
    %105 = vector.extract_strided_slice %61 {offsets = [7, 0], sizes = [1, 128], strides = [1, 1]} : vector<16x128xf32> to vector<1x128xf32>
    %106 = arith.truncf %105 : vector<1x128xf32> to vector<1x128xbf16>
    %c7_63 = arith.constant 7 : index
    %c0_64 = arith.constant 0 : index
    %c0_65 = arith.constant 0 : index
    %107 = vector.load %arg4[%c7_63, %c0_64, %c0_65] : memref<16x128x128xbf16, #tpu.memory_space<vmem>>, vector<1x128x128xbf16>
    %108 = vector.shape_cast %107 : vector<1x128x128xbf16> to vector<128x128xbf16>
    %cst_66 = arith.constant dense<0.000000e+00> : vector<1x128xf32>
    %109 = tpu.matmul %106, %108, %cst_66 {dimension_numbers = #tpu.dot_dimension_numbers<[1], [0], [0], [1], [0, 0, 1, 1], [], []>} : vector<1x128xbf16>, vector<128x128xbf16>, vector<1x128xf32> -> vector<1x128xf32>
    %110 = arith.addf %104, %109 : vector<1x128xf32>
    %111 = vector.extract_strided_slice %61 {offsets = [8, 0], sizes = [1, 128], strides = [1, 1]} : vector<16x128xf32> to vector<1x128xf32>
    %112 = arith.truncf %111 : vector<1x128xf32> to vector<1x128xbf16>
    %c8_67 = arith.constant 8 : index
    %c0_68 = arith.constant 0 : index
    %c0_69 = arith.constant 0 : index
    %113 = vector.load %arg4[%c8_67, %c0_68, %c0_69] : memref<16x128x128xbf16, #tpu.memory_space<vmem>>, vector<1x128x128xbf16>
    %114 = vector.shape_cast %113 : vector<1x128x128xbf16> to vector<128x128xbf16>
    %cst_70 = arith.constant dense<0.000000e+00> : vector<1x128xf32>
    %115 = tpu.matmul %112, %114, %cst_70 {dimension_numbers = #tpu.dot_dimension_numbers<[1], [0], [0], [1], [0, 0, 1, 1], [], []>} : vector<1x128xbf16>, vector<128x128xbf16>, vector<1x128xf32> -> vector<1x128xf32>
    %116 = arith.addf %110, %115 : vector<1x128xf32>
    %117 = vector.extract_strided_slice %61 {offsets = [9, 0], sizes = [1, 128], strides = [1, 1]} : vector<16x128xf32> to vector<1x128xf32>
    %118 = arith.truncf %117 : vector<1x128xf32> to vector<1x128xbf16>
    %c9 = arith.constant 9 : index
    %c0_71 = arith.constant 0 : index
    %c0_72 = arith.constant 0 : index
    %119 = vector.load %arg4[%c9, %c0_71, %c0_72] : memref<16x128x128xbf16, #tpu.memory_space<vmem>>, vector<1x128x128xbf16>
    %120 = vector.shape_cast %119 : vector<1x128x128xbf16> to vector<128x128xbf16>
    %cst_73 = arith.constant dense<0.000000e+00> : vector<1x128xf32>
    %121 = tpu.matmul %118, %120, %cst_73 {dimension_numbers = #tpu.dot_dimension_numbers<[1], [0], [0], [1], [0, 0, 1, 1], [], []>} : vector<1x128xbf16>, vector<128x128xbf16>, vector<1x128xf32> -> vector<1x128xf32>
    %122 = arith.addf %116, %121 : vector<1x128xf32>
    %123 = vector.extract_strided_slice %61 {offsets = [10, 0], sizes = [1, 128], strides = [1, 1]} : vector<16x128xf32> to vector<1x128xf32>
    %124 = arith.truncf %123 : vector<1x128xf32> to vector<1x128xbf16>
    %c10 = arith.constant 10 : index
    %c0_74 = arith.constant 0 : index
    %c0_75 = arith.constant 0 : index
    %125 = vector.load %arg4[%c10, %c0_74, %c0_75] : memref<16x128x128xbf16, #tpu.memory_space<vmem>>, vector<1x128x128xbf16>
    %126 = vector.shape_cast %125 : vector<1x128x128xbf16> to vector<128x128xbf16>
    %cst_76 = arith.constant dense<0.000000e+00> : vector<1x128xf32>
    %127 = tpu.matmul %124, %126, %cst_76 {dimension_numbers = #tpu.dot_dimension_numbers<[1], [0], [0], [1], [0, 0, 1, 1], [], []>} : vector<1x128xbf16>, vector<128x128xbf16>, vector<1x128xf32> -> vector<1x128xf32>
    %128 = arith.addf %122, %127 : vector<1x128xf32>
    %129 = vector.extract_strided_slice %61 {offsets = [11, 0], sizes = [1, 128], strides = [1, 1]} : vector<16x128xf32> to vector<1x128xf32>
    %130 = arith.truncf %129 : vector<1x128xf32> to vector<1x128xbf16>
    %c11 = arith.constant 11 : index
    %c0_77 = arith.constant 0 : index
    %c0_78 = arith.constant 0 : index
    %131 = vector.load %arg4[%c11, %c0_77, %c0_78] : memref<16x128x128xbf16, #tpu.memory_space<vmem>>, vector<1x128x128xbf16>
    %132 = vector.shape_cast %131 : vector<1x128x128xbf16> to vector<128x128xbf16>
    %cst_79 = arith.constant dense<0.000000e+00> : vector<1x128xf32>
    %133 = tpu.matmul %130, %132, %cst_79 {dimension_numbers = #tpu.dot_dimension_numbers<[1], [0], [0], [1], [0, 0, 1, 1], [], []>} : vector<1x128xbf16>, vector<128x128xbf16>, vector<1x128xf32> -> vector<1x128xf32>
    %134 = arith.addf %128, %133 : vector<1x128xf32>
    %135 = vector.extract_strided_slice %61 {offsets = [12, 0], sizes = [1, 128], strides = [1, 1]} : vector<16x128xf32> to vector<1x128xf32>
    %136 = arith.truncf %135 : vector<1x128xf32> to vector<1x128xbf16>
    %c12 = arith.constant 12 : index
    %c0_80 = arith.constant 0 : index
    %c0_81 = arith.constant 0 : index
    %137 = vector.load %arg4[%c12, %c0_80, %c0_81] : memref<16x128x128xbf16, #tpu.memory_space<vmem>>, vector<1x128x128xbf16>
    %138 = vector.shape_cast %137 : vector<1x128x128xbf16> to vector<128x128xbf16>
    %cst_82 = arith.constant dense<0.000000e+00> : vector<1x128xf32>
    %139 = tpu.matmul %136, %138, %cst_82 {dimension_numbers = #tpu.dot_dimension_numbers<[1], [0], [0], [1], [0, 0, 1, 1], [], []>} : vector<1x128xbf16>, vector<128x128xbf16>, vector<1x128xf32> -> vector<1x128xf32>
    %140 = arith.addf %134, %139 : vector<1x128xf32>
    %141 = vector.extract_strided_slice %61 {offsets = [13, 0], sizes = [1, 128], strides = [1, 1]} : vector<16x128xf32> to vector<1x128xf32>
    %142 = arith.truncf %141 : vector<1x128xf32> to vector<1x128xbf16>
    %c13 = arith.constant 13 : index
    %c0_83 = arith.constant 0 : index
    %c0_84 = arith.constant 0 : index
    %143 = vector.load %arg4[%c13, %c0_83, %c0_84] : memref<16x128x128xbf16, #tpu.memory_space<vmem>>, vector<1x128x128xbf16>
    %144 = vector.shape_cast %143 : vector<1x128x128xbf16> to vector<128x128xbf16>
    %cst_85 = arith.constant dense<0.000000e+00> : vector<1x128xf32>
    %145 = tpu.matmul %142, %144, %cst_85 {dimension_numbers = #tpu.dot_dimension_numbers<[1], [0], [0], [1], [0, 0, 1, 1], [], []>} : vector<1x128xbf16>, vector<128x128xbf16>, vector<1x128xf32> -> vector<1x128xf32>
    %146 = arith.addf %140, %145 : vector<1x128xf32>
    %147 = vector.extract_strided_slice %61 {offsets = [14, 0], sizes = [1, 128], strides = [1, 1]} : vector<16x128xf32> to vector<1x128xf32>
    %148 = arith.truncf %147 : vector<1x128xf32> to vector<1x128xbf16>
    %c14 = arith.constant 14 : index
    %c0_86 = arith.constant 0 : index
    %c0_87 = arith.constant 0 : index
    %149 = vector.load %arg4[%c14, %c0_86, %c0_87] : memref<16x128x128xbf16, #tpu.memory_space<vmem>>, vector<1x128x128xbf16>
    %150 = vector.shape_cast %149 : vector<1x128x128xbf16> to vector<128x128xbf16>
    %cst_88 = arith.constant dense<0.000000e+00> : vector<1x128xf32>
    %151 = tpu.matmul %148, %150, %cst_88 {dimension_numbers = #tpu.dot_dimension_numbers<[1], [0], [0], [1], [0, 0, 1, 1], [], []>} : vector<1x128xbf16>, vector<128x128xbf16>, vector<1x128xf32> -> vector<1x128xf32>
    %152 = arith.addf %146, %151 : vector<1x128xf32>
    %153 = vector.extract_strided_slice %61 {offsets = [15, 0], sizes = [1, 128], strides = [1, 1]} : vector<16x128xf32> to vector<1x128xf32>
    %154 = arith.truncf %153 : vector<1x128xf32> to vector<1x128xbf16>
    %c15 = arith.constant 15 : index
    %c0_89 = arith.constant 0 : index
    %c0_90 = arith.constant 0 : index
    %155 = vector.load %arg4[%c15, %c0_89, %c0_90] : memref<16x128x128xbf16, #tpu.memory_space<vmem>>, vector<1x128x128xbf16>
    %156 = vector.shape_cast %155 : vector<1x128x128xbf16> to vector<128x128xbf16>
    %cst_91 = arith.constant dense<0.000000e+00> : vector<1x128xf32>
    %157 = tpu.matmul %154, %156, %cst_91 {dimension_numbers = #tpu.dot_dimension_numbers<[1], [0], [0], [1], [0, 0, 1, 1], [], []>} : vector<1x128xbf16>, vector<128x128xbf16>, vector<1x128xf32> -> vector<1x128xf32>
    %158 = arith.addf %152, %157 : vector<1x128xf32>
    %cst_92 = arith.constant 0.000000e+00 : f32
    %159 = vector.broadcast %cst_92 : f32 to vector<1x128xf32>
    %160 = arith.maximumf %158, %159 : vector<1x128xf32>
    %c0_93 = arith.constant 0 : index
    %c0_94 = arith.constant 0 : index
    %c0_95 = arith.constant 0 : index
    %161 = vector.load %arg6[%c0_93, %c0_94, %c0_95] : memref<1x1x128xf32, #tpu.memory_space<vmem>>, vector<1x1x128xf32>
    %162 = vector.shape_cast %161 : vector<1x1x128xf32> to vector<1x128xf32>
    %163 = vector.shape_cast %160 : vector<1x128xf32> to vector<1x1x128xf32>
    tpu.vector_store %arg6[%c0_93, %c0_94, %c0_95], %163 {strides = array<i32>} : memref<1x1x128xf32, #tpu.memory_space<vmem>>, vector<1x1x128xf32>,
    return
  }
  func.func @transform_0(%arg0: i32) -> (i32, i32, i32) {
    %c0_i32 = arith.constant 0 : i32
    %c0_i32_0 = arith.constant 0 : i32
    %c0_i32_1 = arith.constant 0 : i32
    return %arg0, %c0_i32, %c0_i32_0 : i32, i32, i32
  }
  func.func @transform_1(%arg0: i32) -> (i32, i32, i32) {
    %c0_i32 = arith.constant 0 : i32
    %c0_i32_0 = arith.constant 0 : i32
    %c0_i32_1 = arith.constant 0 : i32
    %c0_i32_2 = arith.constant 0 : i32
    return %c0_i32, %c0_i32_0, %c0_i32_1 : i32, i32, i32
  }
  func.func @transform_2(%arg0: i32) -> (i32, i32) {
    %c0_i32 = arith.constant 0 : i32
    %c0_i32_0 = arith.constant 0 : i32
    %c0_i32_1 = arith.constant 0 : i32
    return %c0_i32, %c0_i32_0 : i32, i32
  }
  func.func @transform_3(%arg0: i32) -> (i32, i32, i32) {
    %c0_i32 = arith.constant 0 : i32
    %c0_i32_0 = arith.constant 0 : i32
    %c0_i32_1 = arith.constant 0 : i32
    %c0_i32_2 = arith.constant 0 : i32
    return %c0_i32, %c0_i32_0, %c0_i32_1 : i32, i32, i32
  }
  func.func @transform_4(%arg0: i32) -> (i32, i32) {
    %c0_i32 = arith.constant 0 : i32
    %c0_i32_0 = arith.constant 0 : i32
    %c0_i32_1 = arith.constant 0 : i32
    return %c0_i32, %c0_i32_0 : i32, i32
  }
  func.func @transform_5(%arg0: i32) -> (i32, i32, i32) {
    %c0_i32 = arith.constant 0 : i32
    %c0_i32_0 = arith.constant 0 : i32
    %c0_i32_1 = arith.constant 0 : i32
    return %arg0, %c0_i32, %c0_i32_0 : i32, i32, i32
  }
}

</mosaic_0001>

<llo_original>
// kernel: parsed_network_forward.1
$region0: #{parsed_network_forward.1}
  #allocation0 [shape = 'u32[]', space=smem, size = 0x4, offset = 0x4, fixed_abs, tag = 'smem constant byte address 0x4 - core index']
  #allocation1 [shape = 'u32[72,128]{1,0:T(1,128)}', space=vmem, size = 0x9000, scoped, tag = 'internal scratch']
  %s0 = inlined_call_operand.vmem [shape: f32[2,18,72], index: 0, kind: input, shape index: {}]
  %s1 = inlined_call_operand.vmem [shape: bf16[9,64,128], index: 1, kind: input, shape index: {}]
  %s2 = inlined_call_operand.vmem [shape: f32[1,128], index: 2, kind: input, shape index: {}]
  %s3 = inlined_call_operand.hbm [shape: bf16[16,128,128], index: 3, kind: input, shape index: {}]
  %s4 = inlined_call_operand.vmem [shape: f32[1,128], index: 4, kind: input, shape index: {}]
  %s5 = inlined_call_operand.hbm [shape: f32[2,1,128], index: 5, kind: output, shape index: {}]
  %s6 = sld [smem:[#allocation0]]
  $region57: #{parsed_network_forward.1} parent=0
    _
  %s8 = ssub.s32 1, %s6
  %s9 = scalar_select 0, %s8, %s6
  $region1: #{parsed_network_forward.1} parent=0
    #allocation2 [shape = 'u8[524288]{0}', space=vmem, size = 0x80000, scoped, tag = 'input window, operand 3, single buffered']
    #allocation3 [shape = 's32[2]{0}', space=sflag, size = 0x8, scoped, tag = 'scoped memory for parsed_network_forward.1']
    #allocation4 [shape = 's32[2]{0}', space=sflag, size = 0x8, scoped, tag = 'scoped memory for parsed_network_forward.1']
    #allocation5 [shape = 'u8[1024]{0}', space=vmem, size = 0x400, scoped, tag = 'output window, operand 0']
    %10 = vsyncpa [#allocation3], 0
    %11 = vsyncpa [#allocation4], 0
    %s12 = scalar_lea.sflag [#allocation4], 1
    %13 = vsyncpa %s12, 0
    loop: start=0, step=1, limit=4
    $region2: #{parsed_network_forward.1} parent=1 // loop_pre_header
      _
    $region3: #{parsed_network_forward.1} parent=1 // loop_header
      %s15 = sphi 0, %s19
      %p16 = scmp.ge.s32.totalorder %s15, 4
      %s25 = sphi 0, %s27
      %s28 = sphi 0, %s25
      %s29 = sphi 0, %s28
      %s45 = sphi 0, %s29
      %s49 = sphi 0, %s49
      %s51 = sphi 0, %s49
      %s52 = sphi 0, %s51
      %s66 = sphi 0, %s52
      %s70 = sphi 0, %s70
      %s72 = sphi 0, %s70
      %s73 = sphi 0, %s72
      %s87 = sphi 0, %s73
      %s91 = sphi 0, %s91
      %s93 = sphi 0, %s91
      %s94 = sphi 0, %s93
      %s108 = sphi 0, %s94
      %s112 = sphi 0, %s112
      %s114 = sphi 0, %s112
      %s115 = sphi 0, %s114
      %s129 = sphi 0, %s115
      %s135 = sphi 0, %s137
      %s138 = sphi 0, %s135
      %s139 = sphi 0, %s138
      %s155 = sphi 0, %s139
    $region4: #{parsed_network_forward.1} parent=1 // loop_header_branch
      %18 = sbr.rel (%p16) target = $region8
    $region5: #{parsed_network_forward.1} parent=1 // loop_body
      %s20 = ssub.s32 %s15, 1
      %s21 = ssub.s32 %s15, 2
      %s22 = sadd.s32 %s15, 1
      %s23 = ssub.s32 %s15, %s22
      %p24 = scmp.eq.s32.totalorder %s23, 0
      %s26 = sadd.s32 %s25, 1
      %s27 = scalar_select %p24, %s25, %s26
      %p30 = pneg %p24
      %p31 = scmp.eq.s32.totalorder %s15, 1
      %p32 = por %p30, %p31
      %p33 = scmp.ne.s32.totalorder %s25, %s28
      %p34 = scmp.eq.s32.totalorder %s15, 0
      %p35 = por %p33, %p34
      %p36 = scmp.ne.s32.totalorder %s25, %s28
      %p37 = scmp.eq.s32.totalorder %s20, 1
      %p38 = por %p36, %p37
      %p39 = scmp.ne.s32.totalorder %s28, %s29
      %p40 = scmp.eq.s32.totalorder %s20, 0
      %p41 = por %p39, %p40
      %p42 = scmp.ne.s32.totalorder %s28, %s29
      %p43 = scmp.eq.s32.totalorder %s21, 1
      %p44 = por %p42, %p43
      %p46 = scmp.ne.s32.totalorder %s29, %s45
      %p47 = scmp.eq.s32.totalorder %s21, 0
      %p48 = por %p46, %p47
      %s50 = sadd.s32 %s49, 1
      %p53 = scmp.eq.s32.totalorder %s15, 1
      %p54 = scmp.ne.s32.totalorder %s49, %s51
      %p55 = scmp.eq.s32.totalorder %s15, 0
      %p56 = por %p54, %p55
      %p57 = scmp.ne.s32.totalorder %s49, %s51
      %p58 = scmp.eq.s32.totalorder %s20, 1
      %p59 = por %p57, %p58
      %p60 = scmp.ne.s32.totalorder %s51, %s52
      %p61 = scmp.eq.s32.totalorder %s20, 0
      %p62 = por %p60, %p61
      %p63 = scmp.ne.s32.totalorder %s51, %s52
      %p64 = scmp.eq.s32.totalorder %s21, 1
      %p65 = por %p63, %p64
      %p67 = scmp.ne.s32.totalorder %s52, %s66
      %p68 = scmp.eq.s32.totalorder %s21, 0
      %p69 = por %p67, %p68
      %s71 = sadd.s32 %s70, 1
      %p74 = scmp.eq.s32.totalorder %s15, 1
      %p75 = scmp.ne.s32.totalorder %s70, %s72
      %p76 = scmp.eq.s32.totalorder %s15, 0
      %p77 = por %p75, %p76
      %p78 = scmp.ne.s32.totalorder %s70, %s72
      %p79 = scmp.eq.s32.totalorder %s20, 1
      %p80 = por %p78, %p79
      %p81 = scmp.ne.s32.totalorder %s72, %s73
      %p82 = scmp.eq.s32.totalorder %s20, 0
      %p83 = por %p81, %p82
      %p84 = scmp.ne.s32.totalorder %s72, %s73
      %p85 = scmp.eq.s32.totalorder %s21, 1
      %p86 = por %p84, %p85
      %p88 = scmp.ne.s32.totalorder %s73, %s87
      %p89 = scmp.eq.s32.totalorder %s21, 0
      %p90 = por %p88, %p89
      %s92 = sadd.s32 %s91, 1
      %p95 = scmp.eq.s32.totalorder %s15, 1
      %p96 = scmp.ne.s32.totalorder %s91, %s93
      %p97 = scmp.eq.s32.totalorder %s15, 0
      %p98 = por %p96, %p97
      %p99 = scmp.ne.s32.totalorder %s91, %s93
      %p100 = scmp.eq.s32.totalorder %s20, 1
      %p101 = por %p99, %p100
      %p102 = scmp.ne.s32.totalorder %s93, %s94
      %p103 = scmp.eq.s32.totalorder %s20, 0
      %p104 = por %p102, %p103
      %p105 = scmp.ne.s32.totalorder %s93, %s94
      %p106 = scmp.eq.s32.totalorder %s21, 1
      %p107 = por %p105, %p106
      %p109 = scmp.ne.s32.totalorder %s94, %s108
      %p110 = scmp.eq.s32.totalorder %s21, 0
      %p111 = por %p109, %p110
      %s113 = sadd.s32 %s112, 1
      %p116 = scmp.eq.s32.totalorder %s15, 1
      %p117 = scmp.ne.s32.totalorder %s112, %s114
      %p118 = scmp.eq.s32.totalorder %s15, 0
      %p119 = por %p117, %p118
      %p120 = scmp.ne.s32.totalorder %s112, %s114
      %p121 = scmp.eq.s32.totalorder %s20, 1
      %p122 = por %p120, %p121
      %p123 = scmp.ne.s32.totalorder %s114, %s115
      %p124 = scmp.eq.s32.totalorder %s20, 0
      %p125 = por %p123, %p124
      %p126 = scmp.ne.s32.totalorder %s114, %s115
      %p127 = scmp.eq.s32.totalorder %s21, 1
      %p128 = por %p126, %p127
      %p130 = scmp.ne.s32.totalorder %s115, %s129
      %p131 = scmp.eq.s32.totalorder %s21, 0
      %p132 = por %p130, %p131
      %s133 = ssub.s32 %s15, %s22
      %p134 = scmp.eq.s32.totalorder %s133, 0
      %s136 = sadd.s32 %s135, 1
      %s137 = scalar_select %p134, %s135, %s136
      %p140 = pneg %p134
      %p141 = scmp.eq.s32.totalorder %s15, 1
      %p142 = por %p140, %p141
      %p143 = scmp.ne.s32.totalorder %s135, %s138
      %p144 = scmp.eq.s32.totalorder %s15, 0
      %p145 = por %p143, %p144
      %p146 = scmp.ne.s32.totalorder %s135, %s138
      %p147 = scmp.eq.s32.totalorder %s20, 1
      %p148 = por %p146, %p147
      %p149 = scmp.ne.s32.totalorder %s138, %s139
      %p150 = scmp.eq.s32.totalorder %s20, 0
      %p151 = por %p149, %p150
      %p152 = scmp.ne.s32.totalorder %s138, %s139
      %p153 = scmp.eq.s32.totalorder %s21, 1
      %p154 = por %p152, %p153
      %p156 = scmp.ne.s32.totalorder %s139, %s155
      %p157 = scmp.eq.s32.totalorder %s21, 0
      %p158 = por %p156, %p157
      %p159 = scmp.le.s32.totalorder 1, %s15
      %p160 = scmp.lt.s32.totalorder %s15, 3
      %p161 = pnand %p159, %p160
      %p162 = pneg %p161
      // Predicated region
      $region9: #{parsed_network_forward.1} parent=5 // pred_check
        _
      $region10: #{parsed_network_forward.1} parent=5 // pred_check_branch
        %164 = sbr.rel (%p161) target = $region12
      $region11: #{parsed_network_forward.1} parent=5 // pred_region
        %s165 = ssub.s32 %s15, 1
        // Predicated region
        $region13: #{parsed_network_forward.1} parent=11 // pred_check
          %p166 = pneg %p62
        $region14: #{parsed_network_forward.1} parent=11 // pred_check_branch
          %168 = sbr.rel (%p166) target = $region16
        $region15: #{parsed_network_forward.1} parent=11 // pred_region
          _
        $region16: #{parsed_network_forward.1} parent=11 // pred_fallthru
          _
        // Predicated region
        $region17: #{parsed_network_forward.1} parent=11 // pred_check
          %p169 = pneg %p83
        $region18: #{parsed_network_forward.1} parent=11 // pred_check_branch
          %171 = sbr.rel (%p169) target = $region20
        $region19: #{parsed_network_forward.1} parent=11 // pred_region
          _
        $region20: #{parsed_network_forward.1} parent=11 // pred_fallthru
          _
        // Predicated region
        $region21: #{parsed_network_forward.1} parent=11 // pred_check
          %p172 = pneg %p104
        $region22: #{parsed_network_forward.1} parent=11 // pred_check_branch
          %174 = sbr.rel (%p172) target = $region24
        $region23: #{parsed_network_forward.1} parent=11 // pred_region
          %176 = vsyncadd [#allocation3], 0
          %s177 = sshll.u32 %s3, 4
          %s178 = int_to_ptr.hbm [resolvable:$true] %s177
          %s179 = sshll.u32 [#allocation2], 4
          %s180 = int_to_ptr.vmem [resolvable:$true] %s179
          %185 = dma.hbm_to_vmem [thread:$0]  %s178, 16384, %s180, [#allocation3], 64, 64, 4
        $region24: #{parsed_network_forward.1} parent=11 // pred_fallthru
          _
        // Predicated region
        $region25: #{parsed_network_forward.1} parent=11 // pred_check
          %p186 = pneg %p125
        $region26: #{parsed_network_forward.1} parent=11 // pred_check_branch
          %188 = sbr.rel (%p186) target = $region28
        $region27: #{parsed_network_forward.1} parent=11 // pred_region
          _
        $region28: #{parsed_network_forward.1} parent=11 // pred_fallthru
          _
      $region12: #{parsed_network_forward.1} parent=5 // pred_fallthru
        _
      %p189 = scmp.lt.s32.totalorder %s15, 2
      // Predicated region
      $region29: #{parsed_network_forward.1} parent=5 // pred_check
        %p190 = pneg %p189
      $region30: #{parsed_network_forward.1} parent=5 // pred_check_branch
        %192 = sbr.rel (%p190) target = $region32
      $region31: #{parsed_network_forward.1} parent=5 // pred_region
        // Predicated region
        $region33: #{parsed_network_forward.1} parent=31 // pred_check
          %p193 = pneg %p35
        $region34: #{parsed_network_forward.1} parent=31 // pred_check_branch
          %195 = sbr.rel (%p193) target = $region36
        $region35: #{parsed_network_forward.1} parent=31 // pred_region
          %p196 = scmp.lt.s32.totalorder %s15, 1
          %s197 = scalar_select %p196, %s15, 1
          %s198 = smul.addr %s197, 3
          %s199 = smul.addr %s198, 8
          %s200 = scalar_lea.vmem %s0, %s199
        $region36: #{parsed_network_forward.1} parent=31 // pred_fallthru
          _
      $region32: #{parsed_network_forward.1} parent=5 // pred_fallthru
        _
      %p201 = scmp.le.s32.totalorder 1, %s15
      %p202 = scmp.lt.s32.totalorder %s15, 3
      %p203 = pnand %p201, %p202
      %p204 = pneg %p203
      // Predicated region
      $region37: #{parsed_network_forward.1} parent=5 // pred_check
        _
      $region38: #{parsed_network_forward.1} parent=5 // pred_check_branch
        %206 = sbr.rel (%p203) target = $region40
      $region39: #{parsed_network_forward.1} parent=5 // pred_region
        %s207 = ssub.s32 %s15, 1
        // Predicated region
        $region41: #{parsed_network_forward.1} parent=39 // pred_check
          %p208 = pneg %p104
        $region42: #{parsed_network_forward.1} parent=39 // pred_check_branch
          %210 = sbr.rel (%p208) target = $region44
        $region43: #{parsed_network_forward.1} parent=39 // pred_region
          %212 = dma.done [#allocation3], 16384
        $region44: #{parsed_network_forward.1} parent=39 // pred_fallthru
          _
        %p213 = scmp.lt.s32.totalorder %s20, 1
        %s214 = scalar_select %p213, %s20, 1
        %s215 = smul.addr %s214, 3
        %s216 = smul.addr %s215, 8
        %s217 = scalar_lea.vmem %s0, %s216
        %p218 = pneg %p41
        %p219 = pneg %p38
        %p220 = pneg %p62
        %p221 = pneg %p59
        %p222 = pneg %p83
        %p223 = pneg %p80
        %p224 = pneg %p104
        %p225 = pneg %p101
        %p226 = pneg %p125
        %p227 = pneg %p122
        %p228 = pneg %p151
        %p229 = pneg %p148
        %s230 = sand.u32 %s138, 1
        %s231 = scalar_lea.sflag [#allocation4], %s230
        %s232 = sand.u32 %s138, 1
        %s233 = scalar_lea.vmem [#allocation5], %s232
        %p234 = scmp.lt.s32.totalorder %s20, 1
        %s235 = scalar_select %p234, %s20, 1
        %s236 = smul.addr %s235, 3
        %s237 = smul.addr %s236, 8
        %s238 = scalar_lea.vmem %s0, %s237
        %v240 = vld [vmem:[%s238] sm:$0xff]
        %v241 = vld [vmem:[%s238 + $0x8] sm:$0xff]
        %v242 = vld [vmem:[%s238 + $0x10] sm:$0x3]
        %v243 = vpack.c.bf16 %v241, %v240
        %v244 = vld [vmem:[%s1] sm:$0xf]
        %v245 = vld [vmem:[%s1 + $0x4] sm:$0xf]
        %v246 = vld [vmem:[%s1 + $0x8] sm:$0xf]
        %v247 = vld [vmem:[%s1 + $0xc] sm:$0xf]
        %v248 = vld [vmem:[%s1 + $0x10] sm:$0xf]
        %v249 = vld [vmem:[%s1 + $0x14] sm:$0xf]
        %v250 = vld [vmem:[%s1 + $0x18] sm:$0xf]
        %v251 = vld [vmem:[%s1 + $0x1c] sm:$0xf]
        %s252 = scalar_lea.vmem %s1, 32
        %v253 = vld [vmem:[%s252] sm:$0xf]
        %v254 = vld [vmem:[%s252 + $0x4] sm:$0xf]
        %v255 = vld [vmem:[%s252 + $0x8] sm:$0xf]
        %v256 = vld [vmem:[%s252 + $0xc] sm:$0xf]
        %v257 = vld [vmem:[%s252 + $0x10] sm:$0xf]
        %v258 = vld [vmem:[%s252 + $0x14] sm:$0xf]
        %v259 = vld [vmem:[%s252 + $0x18] sm:$0xf]
        %v260 = vld [vmem:[%s252 + $0x1c] sm:$0xf]
        %262 = vrot.lane.b32.xlu0 %v243, 124
        %v263 = vpop.permute.xlu0 %262
        %v272 = vunpack.c.l.b16 %v253
        %v273 = vunpack.c.l.b16 %v254
        %v274 = vunpack.c.l.b16 %v255
        %v275 = vunpack.c.l.b16 %v256
        %v276 = vunpack.c.l.b16 %v257
        %v277 = vunpack.c.l.b16 %v258
        %v278 = vunpack.c.l.b16 %v259
        %v279 = vunpack.c.l.b16 %v260
        %v280 = vpack.c.b16 %v273, %v272
        %v281 = vpack.c.b16 %v275, %v274
        %v282 = vpack.c.b16 %v277, %v276
        %v283 = vpack.c.b16 %v279, %v278
        %vm288 = vcmask 523264
        %v290 = vsel %vm288, %v263, 0
        %292 = vmatpush.bf16.msra.mxu0 0
        %293 = vmatpush.bf16.msra.mxu0 0
        %294 = vmatpush.bf16.msra.mxu0 0
        %295 = vmatpush.bf16.msra.mxu0 0
        %296 = vmatpush.bf16.msra.mxu0 %v283
        %297 = vmatpush.bf16.msra.mxu0 %v282
        %298 = vmatpush.bf16.msra.mxu0 %v281
        %299 = vmatpush.bf16.msra.mxu0 %v280
        %300 = vmatmul.bf16.gmra.mxu0 %v290
        %v301 = vpop.f32.mrf.mxu0
        %v302 = vadd.f32 0.0, %v301
        %v303 = vpop.f32.mrf.mxu0
        %v304 = vadd.f32 0.0, %v303
        %305 = vdwg.mxu0
        %v314 = vunpack.c.l.b16 %v244
        %v315 = vunpack.c.l.b16 %v245
        %v316 = vunpack.c.l.b16 %v246
        %v317 = vunpack.c.l.b16 %v247
        %v318 = vunpack.c.l.b16 %v248
        %v319 = vunpack.c.l.b16 %v249
        %v320 = vunpack.c.l.b16 %v250
        %v321 = vunpack.c.l.b16 %v251
        %v322 = vpack.c.b16 %v315, %v314
        %v323 = vpack.c.b16 %v317, %v316
        %v324 = vpack.c.b16 %v319, %v318
        %v325 = vpack.c.b16 %v321, %v320
        %v331 = vsel %vm288, %v243, 0
        %333 = vmatpush.bf16.msra.mxu0 0
        %334 = vmatpush.bf16.msra.mxu0 0
        %335 = vmatpush.bf16.msra.mxu0 0
        %336 = vmatpush.bf16.msra.mxu0 0
        %337 = vmatpush.bf16.msra.mxu0 %v325
        %338 = vmatpush.bf16.msra.mxu0 %v324
        %339 = vmatpush.bf16.msra.mxu0 %v323
        %340 = vmatpush.bf16.msra.mxu0 %v322
        %341 = vmatmul.bf16.gmra.mxu0 %v331
        %v342 = vpop.f32.mrf.mxu0
        %v343 = vadd.f32 %v302, %v342
        %v344 = vpop.f32.mrf.mxu0
        %v345 = vadd.f32 %v304, %v344
        %346 = vdwg.mxu0
        %s347 = scalar_lea.vmem %s1, 64
        %v348 = vld [vmem:[%s347] sm:$0xf]
        %v349 = vld [vmem:[%s347 + $0x4] sm:$0xf]
        %v350 = vld [vmem:[%s347 + $0x8] sm:$0xf]
        %v351 = vld [vmem:[%s347 + $0xc] sm:$0xf]
        %v352 = vld [vmem:[%s347 + $0x10] sm:$0xf]
        %v353 = vld [vmem:[%s347 + $0x14] sm:$0xf]
        %v354 = vld [vmem:[%s347 + $0x18] sm:$0xf]
        %v355 = vld [vmem:[%s347 + $0x1c] sm:$0xf]
        %356 = vrot.lane.b32.xlu0 %v243, 120
        %v357 = vpop.permute.xlu0 %356
        %v366 = vunpack.c.l.b16 %v348
        %v367 = vunpack.c.l.b16 %v349
        %v368 = vunpack.c.l.b16 %v350
        %v369 = vunpack.c.l.b16 %v351
        %v370 = vunpack.c.l.b16 %v352
        %v371 = vunpack.c.l.b16 %v353
        %v372 = vunpack.c.l.b16 %v354
        %v373 = vunpack.c.l.b16 %v355
        %v374 = vpack.c.b16 %v367, %v366
        %v375 = vpack.c.b16 %v369, %v368
        %v376 = vpack.c.b16 %v371, %v370
        %v377 = vpack.c.b16 %v373, %v372
        %v383 = vsel %vm288, %v357, 0
        %385 = vmatpush.bf16.msra.mxu0 0
        %386 = vmatpush.bf16.msra.mxu0 0
        %387 = vmatpush.bf16.msra.mxu0 0
        %388 = vmatpush.bf16.msra.mxu0 0
        %389 = vmatpush.bf16.msra.mxu0 %v377
        %390 = vmatpush.bf16.msra.mxu0 %v376
        %391 = vmatpush.bf16.msra.mxu0 %v375
        %392 = vmatpush.bf16.msra.mxu0 %v374
        %393 = vmatmul.bf16.gmra.mxu0 %v383
        %v394 = vpop.f32.mrf.mxu0
        %v395 = vadd.f32 0.0, %v394
        %v396 = vpop.f32.mrf.mxu0
        %v397 = vadd.f32 0.0, %v396
        %398 = vdwg.mxu0
        %v399 = vadd.f32 %v343, %v395
        %v400 = vadd.f32 %v345, %v397
        %v401 = vpack.c.bf16 %v242, %v242
        %s402 = scalar_lea.vmem %s1, 96
        %v403 = vld [vmem:[%s402] sm:$0xf]
        %v404 = vld [vmem:[%s402 + $0x4] sm:$0xf]
        %v405 = vld [vmem:[%s402 + $0x8] sm:$0xf]
        %v406 = vld [vmem:[%s402 + $0xc] sm:$0xf]
        %v407 = vld [vmem:[%s402 + $0x10] sm:$0xf]
        %v408 = vld [vmem:[%s402 + $0x14] sm:$0xf]
        %v409 = vld [vmem:[%s402 + $0x18] sm:$0xf]
        %v410 = vld [vmem:[%s402 + $0x1c] sm:$0xf]
        %vm411 = vsmask.f32 7424
        %v412 = vshrl.u32 %v243, 16
        %v414 = vshll.u32 %v243, 16
        %v416 = vrot.slane %v414, 1
        %v417 = vor.u32 %v412, %v416
        %v419 = vshll.u32 %v401, 16
        %v421 = vrot.slane %v419, 1
        %v422 = vsel %vm411, %v417, %v421
        %v431 = vunpack.c.l.b16 %v403
        %v432 = vunpack.c.l.b16 %v404
        %v433 = vunpack.c.l.b16 %v405
        %v434 = vunpack.c.l.b16 %v406
        %v435 = vunpack.c.l.b16 %v407
        %v436 = vunpack.c.l.b16 %v408
        %v437 = vunpack.c.l.b16 %v409
        %v438 = vunpack.c.l.b16 %v410
        %v439 = vpack.c.b16 %v432, %v431
        %v440 = vpack.c.b16 %v434, %v433
        %v441 = vpack.c.b16 %v436, %v435
        %v442 = vpack.c.b16 %v438, %v437
        %v448 = vsel %vm288, %v422, 0
        %450 = vmatpush.bf16.msra.mxu0 0
        %451 = vmatpush.bf16.msra.mxu0 0
        %452 = vmatpush.bf16.msra.mxu0 0
        %453 = vmatpush.bf16.msra.mxu0 0
        %454 = vmatpush.bf16.msra.mxu0 %v442
        %455 = vmatpush.bf16.msra.mxu0 %v441
        %456 = vmatpush.bf16.msra.mxu0 %v440
        %457 = vmatpush.bf16.msra.mxu0 %v439
        %458 = vmatmul.bf16.gmra.mxu0 %v448
        %v459 = vpop.f32.mrf.mxu0
        %v460 = vadd.f32 0.0, %v459
        %v461 = vpop.f32.mrf.mxu0
        %v462 = vadd.f32 0.0, %v461
        %463 = vdwg.mxu0
        %v464 = vadd.f32 %v399, %v460
        %v465 = vadd.f32 %v400, %v462
        %s466 = scalar_lea.vmem %s1, 128
        %v467 = vld [vmem:[%s466] sm:$0xf]
        %v468 = vld [vmem:[%s466 + $0x4] sm:$0xf]
        %v469 = vld [vmem:[%s466 + $0x8] sm:$0xf]
        %v470 = vld [vmem:[%s466 + $0xc] sm:$0xf]
        %v471 = vld [vmem:[%s466 + $0x10] sm:$0xf]
        %v472 = vld [vmem:[%s466 + $0x14] sm:$0xf]
        %v473 = vld [vmem:[%s466 + $0x18] sm:$0xf]
        %v474 = vld [vmem:[%s466 + $0x1c] sm:$0xf]
        %475 = vrot.lane.b32.xlu0 %v422, 124
        %v476 = vpop.permute.xlu0 %475
        %v485 = vunpack.c.l.b16 %v467
        %v486 = vunpack.c.l.b16 %v468
        %v487 = vunpack.c.l.b16 %v469
        %v488 = vunpack.c.l.b16 %v470
        %v489 = vunpack.c.l.b16 %v471
        %v490 = vunpack.c.l.b16 %v472
        %v491 = vunpack.c.l.b16 %v473
        %v492 = vunpack.c.l.b16 %v474
        %v493 = vpack.c.b16 %v486, %v485
        %v494 = vpack.c.b16 %v488, %v487
        %v495 = vpack.c.b16 %v490, %v489
        %v496 = vpack.c.b16 %v492, %v491
        %v502 = vsel %vm288, %v476, 0
        %504 = vmatpush.bf16.msra.mxu0 0
        %505 = vmatpush.bf16.msra.mxu0 0
        %506 = vmatpush.bf16.msra.mxu0 0
        %507 = vmatpush.bf16.msra.mxu0 0
        %508 = vmatpush.bf16.msra.mxu0 %v496
        %509 = vmatpush.bf16.msra.mxu0 %v495
        %510 = vmatpush.bf16.msra.mxu0 %v494
        %511 = vmatpush.bf16.msra.mxu0 %v493
        %512 = vmatmul.bf16.gmra.mxu0 %v502
        %v513 = vpop.f32.mrf.mxu0
        %v514 = vadd.f32 0.0, %v513
        %v515 = vpop.f32.mrf.mxu0
        %v516 = vadd.f32 0.0, %v515
        %517 = vdwg.mxu0
        %v518 = vadd.f32 %v464, %v514
        %v519 = vadd.f32 %v465, %v516
        %s520 = scalar_lea.vmem %s1, 160
        %v521 = vld [vmem:[%s520] sm:$0xf]
        %v522 = vld [vmem:[%s520 + $0x4] sm:$0xf]
        %v523 = vld [vmem:[%s520 + $0x8] sm:$0xf]
        %v524 = vld [vmem:[%s520 + $0xc] sm:$0xf]
        %v525 = vld [vmem:[%s520 + $0x10] sm:$0xf]
        %v526 = vld [vmem:[%s520 + $0x14] sm:$0xf]
        %v527 = vld [vmem:[%s520 + $0x18] sm:$0xf]
        %v528 = vld [vmem:[%s520 + $0x1c] sm:$0xf]
        %529 = vrot.lane.b32.xlu0 %v422, 120
        %v530 = vpop.permute.xlu0 %529
        %v539 = vunpack.c.l.b16 %v521
        %v540 = vunpack.c.l.b16 %v522
        %v541 = vunpack.c.l.b16 %v523
        %v542 = vunpack.c.l.b16 %v524
        %v543 = vunpack.c.l.b16 %v525
        %v544 = vunpack.c.l.b16 %v526
        %v545 = vunpack.c.l.b16 %v527
        %v546 = vunpack.c.l.b16 %v528
        %v547 = vpack.c.b16 %v540, %v539
        %v548 = vpack.c.b16 %v542, %v541
        %v549 = vpack.c.b16 %v544, %v543
        %v550 = vpack.c.b16 %v546, %v545
        %v556 = vsel %vm288, %v530, 0
        %558 = vmatpush.bf16.msra.mxu0 0
        %559 = vmatpush.bf16.msra.mxu0 0
        %560 = vmatpush.bf16.msra.mxu0 0
        %561 = vmatpush.bf16.msra.mxu0 0
        %562 = vmatpush.bf16.msra.mxu0 %v550
        %563 = vmatpush.bf16.msra.mxu0 %v549
        %564 = vmatpush.bf16.msra.mxu0 %v548
        %565 = vmatpush.bf16.msra.mxu0 %v547
        %566 = vmatmul.bf16.gmra.mxu0 %v556
        %v567 = vpop.f32.mrf.mxu0
        %v568 = vadd.f32 0.0, %v567
        %v569 = vpop.f32.mrf.mxu0
        %v570 = vadd.f32 0.0, %v569
        %571 = vdwg.mxu0
        %v572 = vadd.f32 %v518, %v568
        %v573 = vadd.f32 %v519, %v570
        %s574 = scalar_lea.vmem %s1, 192
        %v575 = vld [vmem:[%s574] sm:$0xf]
        %v576 = vld [vmem:[%s574 + $0x4] sm:$0xf]
        %v577 = vld [vmem:[%s574 + $0x8] sm:$0xf]
        %v578 = vld [vmem:[%s574 + $0xc] sm:$0xf]
        %v579 = vld [vmem:[%s574 + $0x10] sm:$0xf]
        %v580 = vld [vmem:[%s574 + $0x14] sm:$0xf]
        %v581 = vld [vmem:[%s574 + $0x18] sm:$0xf]
        %v582 = vld [vmem:[%s574 + $0x1c] sm:$0xf]
        %vm584 = vcmask 1046528
        %v585 = vrot.slane %v243, 1
        %v586 = vrot.slane %v401, 1
        %v587 = vsel %vm584, %v585, %v586
        %v596 = vunpack.c.l.b16 %v575
        %v597 = vunpack.c.l.b16 %v576
        %v598 = vunpack.c.l.b16 %v577
        %v599 = vunpack.c.l.b16 %v578
        %v600 = vunpack.c.l.b16 %v579
        %v601 = vunpack.c.l.b16 %v580
        %v602 = vunpack.c.l.b16 %v581
        %v603 = vunpack.c.l.b16 %v582
        %v604 = vpack.c.b16 %v597, %v596
        %v605 = vpack.c.b16 %v599, %v598
        %v606 = vpack.c.b16 %v601, %v600
        %v607 = vpack.c.b16 %v603, %v602
        %v613 = vsel %vm288, %v587, 0
        %615 = vmatpush.bf16.msra.mxu0 0
        %616 = vmatpush.bf16.msra.mxu0 0
        %617 = vmatpush.bf16.msra.mxu0 0
        %618 = vmatpush.bf16.msra.mxu0 0
        %619 = vmatpush.bf16.msra.mxu0 %v607
        %620 = vmatpush.bf16.msra.mxu0 %v606
        %621 = vmatpush.bf16.msra.mxu0 %v605
        %622 = vmatpush.bf16.msra.mxu0 %v604
        %623 = vmatmul.bf16.gmra.mxu0 %v613
        %v624 = vpop.f32.mrf.mxu0
        %v625 = vadd.f32 0.0, %v624
        %v626 = vpop.f32.mrf.mxu0
        %v627 = vadd.f32 0.0, %v626
        %628 = vdwg.mxu0
        %v629 = vadd.f32 %v572, %v625
        %v630 = vadd.f32 %v573, %v627
        %s631 = scalar_lea.vmem %s1, 224
        %v632 = vld [vmem:[%s631] sm:$0xf]
        %v633 = vld [vmem:[%s631 + $0x4] sm:$0xf]
        %v634 = vld [vmem:[%s631 + $0x8] sm:$0xf]
        %v635 = vld [vmem:[%s631 + $0xc] sm:$0xf]
        %v636 = vld [vmem:[%s631 + $0x10] sm:$0xf]
        %v637 = vld [vmem:[%s631 + $0x14] sm:$0xf]
        %v638 = vld [vmem:[%s631 + $0x18] sm:$0xf]
        %v639 = vld [vmem:[%s631 + $0x1c] sm:$0xf]
        %640 = vrot.lane.b32.xlu0 %v587, 124
        %v641 = vpop.permute.xlu0 %640
        %v650 = vunpack.c.l.b16 %v632
        %v651 = vunpack.c.l.b16 %v633
        %v652 = vunpack.c.l.b16 %v634
        %v653 = vunpack.c.l.b16 %v635
        %v654 = vunpack.c.l.b16 %v636
        %v655 = vunpack.c.l.b16 %v637
        %v656 = vunpack.c.l.b16 %v638
        %v657 = vunpack.c.l.b16 %v639
        %v658 = vpack.c.b16 %v651, %v650
        %v659 = vpack.c.b16 %v653, %v652
        %v660 = vpack.c.b16 %v655, %v654
        %v661 = vpack.c.b16 %v657, %v656
        %v667 = vsel %vm288, %v641, 0
        %669 = vmatpush.bf16.msra.mxu0 0
        %670 = vmatpush.bf16.msra.mxu0 0
        %671 = vmatpush.bf16.msra.mxu0 0
        %672 = vmatpush.bf16.msra.mxu0 0
        %673 = vmatpush.bf16.msra.mxu0 %v661
        %674 = vmatpush.bf16.msra.mxu0 %v660
        %675 = vmatpush.bf16.msra.mxu0 %v659
        %676 = vmatpush.bf16.msra.mxu0 %v658
        %677 = vmatmul.bf16.gmra.mxu0 %v667
        %v678 = vpop.f32.mrf.mxu0
        %v679 = vadd.f32 0.0, %v678
        %v680 = vpop.f32.mrf.mxu0
        %v681 = vadd.f32 0.0, %v680
        %682 = vdwg.mxu0
        %v683 = vadd.f32 %v629, %v679
        %v684 = vadd.f32 %v630, %v681
        %s685 = scalar_lea.vmem %s1, 256
        %v686 = vld [vmem:[%s685] sm:$0xf]
        %v687 = vld [vmem:[%s685 + $0x4] sm:$0xf]
        %v688 = vld [vmem:[%s685 + $0x8] sm:$0xf]
        %v689 = vld [vmem:[%s685 + $0xc] sm:$0xf]
        %v690 = vld [vmem:[%s685 + $0x10] sm:$0xf]
        %v691 = vld [vmem:[%s685 + $0x14] sm:$0xf]
        %v692 = vld [vmem:[%s685 + $0x18] sm:$0xf]
        %v693 = vld [vmem:[%s685 + $0x1c] sm:$0xf]
        %694 = vrot.lane.b32.xlu0 %v587, 120
        %v695 = vpop.permute.xlu0 %694
        %v704 = vunpack.c.l.b16 %v686
        %v705 = vunpack.c.l.b16 %v687
        %v706 = vunpack.c.l.b16 %v688
        %v707 = vunpack.c.l.b16 %v689
        %v708 = vunpack.c.l.b16 %v690
        %v709 = vunpack.c.l.b16 %v691
        %v710 = vunpack.c.l.b16 %v692
        %v711 = vunpack.c.l.b16 %v693
        %v712 = vpack.c.b16 %v705, %v704
        %v713 = vpack.c.b16 %v707, %v706
        %v714 = vpack.c.b16 %v709, %v708
        %v715 = vpack.c.b16 %v711, %v710
        %v721 = vsel %vm288, %v695, 0
        %723 = vmatpush.bf16.msra.mxu0 0
        %724 = vmatpush.bf16.msra.mxu0 0
        %725 = vmatpush.bf16.msra.mxu0 0
        %726 = vmatpush.bf16.msra.mxu0 0
        %727 = vmatpush.bf16.msra.mxu0 %v715
        %728 = vmatpush.bf16.msra.mxu0 %v714
        %729 = vmatpush.bf16.msra.mxu0 %v713
        %730 = vmatpush.bf16.msra.mxu0 %v712
        %731 = vmatmul.bf16.gmra.mxu0 %v721
        %v732 = vpop.f32.mrf.mxu0
        %v733 = vadd.f32 0.0, %v732
        %v734 = vpop.f32.mrf.mxu0
        %v735 = vadd.f32 0.0, %v734
        %736 = vdwg.mxu0
        %v737 = vadd.f32 %v683, %v733
        %v738 = vadd.f32 %v684, %v735
        %v739 = vld [vmem:[%s2] sm:$0x1]
        %v741 = vperm.slane %v739, 0
        %v743 = vadd.f32 %v737, %v741
        %v744 = vadd.f32 %v738, %v741
        %v745 = vmax.f32 %v743, 0.0
        %v746 = vmax.f32 %v744, 0.0
        %v747 = vld [vmem:[%s4] sm:$0x1]
        %v748 = vpack.c.bf16 %v745, %v745
        %v749 = vld [vmem:[#allocation2] sm:$0xf]
        %v750 = vld [vmem:[#allocation2 + $0x4] sm:$0xf]
        %v751 = vld [vmem:[#allocation2 + $0x8] sm:$0xf]
        %v752 = vld [vmem:[#allocation2 + $0xc] sm:$0xf]
        %v753 = vld [vmem:[#allocation2 + $0x10] sm:$0xf]
        %v754 = vld [vmem:[#allocation2 + $0x14] sm:$0xf]
        %v755 = vld [vmem:[#allocation2 + $0x18] sm:$0xf]
        %v756 = vld [vmem:[#allocation2 + $0x1c] sm:$0xf]
        %v757 = vld [vmem:[#allocation2 + $0x20] sm:$0xf]
        %v758 = vld [vmem:[#allocation2 + $0x24] sm:$0xf]
        %v759 = vld [vmem:[#allocation2 + $0x28] sm:$0xf]
        %v760 = vld [vmem:[#allocation2 + $0x2c] sm:$0xf]
        %v761 = vld [vmem:[#allocation2 + $0x30] sm:$0xf]
        %v762 = vld [vmem:[#allocation2 + $0x34] sm:$0xf]
        %v763 = vld [vmem:[#allocation2 + $0x38] sm:$0xf]
        %v764 = vld [vmem:[#allocation2 + $0x3c] sm:$0xf]
        %v781 = vunpack.c.l.b16 %v749
        %v782 = vunpack.c.l.b16 %v750
        %v783 = vunpack.c.l.b16 %v751
        %v784 = vunpack.c.l.b16 %v752
        %v785 = vunpack.c.l.b16 %v753
        %v786 = vunpack.c.l.b16 %v754
        %v787 = vunpack.c.l.b16 %v755
        %v788 = vunpack.c.l.b16 %v756
        %v789 = vunpack.c.l.b16 %v757
        %v790 = vunpack.c.l.b16 %v758
        %v791 = vunpack.c.l.b16 %v759
        %v792 = vunpack.c.l.b16 %v760
        %v793 = vunpack.c.l.b16 %v761
        %v794 = vunpack.c.l.b16 %v762
        %v795 = vunpack.c.l.b16 %v763
        %v796 = vunpack.c.l.b16 %v764
        %v797 = vpack.c.b16 %v782, %v781
        %v798 = vpack.c.b16 %v784, %v783
        %v799 = vpack.c.b16 %v786, %v785
        %v800 = vpack.c.b16 %v788, %v787
        %v801 = vpack.c.b16 %v790, %v789
        %v802 = vpack.c.b16 %v792, %v791
        %v803 = vpack.c.b16 %v794, %v793
        %v804 = vpack.c.b16 %v796, %v795
        %813 = vmatpush.bf16.msra.mxu0 %v804
        %814 = vmatpush.bf16.msra.mxu0 %v803
        %815 = vmatpush.bf16.msra.mxu0 %v802
        %816 = vmatpush.bf16.msra.mxu0 %v801
        %817 = vmatpush.bf16.msra.mxu0 %v800
        %818 = vmatpush.bf16.msra.mxu0 %v799
        %819 = vmatpush.bf16.msra.mxu0 %v798
        %820 = vmatpush.bf16.msra.mxu0 %v797
        %821 = vmatmul.bf16.gmra.mxu0 %v748
        %v822 = vpop.f32.mrf.mxu0
        %v823 = vadd.f32 0.0, %v822
        %v824 = vpop.f32.mrf.mxu0
        %825 = vdwg.mxu0
        %v826 = vadd.f32 %v747, %v823
        %s827 = scalar_lea.vmem [#allocation2], 64
        %v828 = vld [vmem:[%s827] sm:$0xf]
        %v829 = vld [vmem:[%s827 + $0x4] sm:$0xf]
        %v830 = vld [vmem:[%s827 + $0x8] sm:$0xf]
        %v831 = vld [vmem:[%s827 + $0xc] sm:$0xf]
        %v832 = vld [vmem:[%s827 + $0x10] sm:$0xf]
        %v833 = vld [vmem:[%s827 + $0x14] sm:$0xf]
        %v834 = vld [vmem:[%s827 + $0x18] sm:$0xf]
        %v835 = vld [vmem:[%s827 + $0x1c] sm:$0xf]
        %v836 = vld [vmem:[%s827 + $0x20] sm:$0xf]
        %v837 = vld [vmem:[%s827 + $0x24] sm:$0xf]
        %v838 = vld [vmem:[%s827 + $0x28] sm:$0xf]
        %v839 = vld [vmem:[%s827 + $0x2c] sm:$0xf]
        %v840 = vld [vmem:[%s827 + $0x30] sm:$0xf]
        %v841 = vld [vmem:[%s827 + $0x34] sm:$0xf]
        %v842 = vld [vmem:[%s827 + $0x38] sm:$0xf]
        %v843 = vld [vmem:[%s827 + $0x3c] sm:$0xf]
        %v845 = vshrl.u32 %v748, 16
        %v864 = vunpack.c.l.b16 %v828
        %v865 = vunpack.c.l.b16 %v829
        %v866 = vunpack.c.l.b16 %v830
        %v867 = vunpack.c.l.b16 %v831
        %v868 = vunpack.c.l.b16 %v832
        %v869 = vunpack.c.l.b16 %v833
        %v870 = vunpack.c.l.b16 %v834
        %v871 = vunpack.c.l.b16 %v835
        %v872 = vunpack.c.l.b16 %v836
        %v873 = vunpack.c.l.b16 %v837
        %v874 = vunpack.c.l.b16 %v838
        %v875 = vunpack.c.l.b16 %v839
        %v876 = vunpack.c.l.b16 %v840
        %v877 = vunpack.c.l.b16 %v841
        %v878 = vunpack.c.l.b16 %v842
        %v879 = vunpack.c.l.b16 %v843
        %v880 = vpack.c.b16 %v865, %v864
        %v881 = vpack.c.b16 %v867, %v866
        %v882 = vpack.c.b16 %v869, %v868
        %v883 = vpack.c.b16 %v871, %v870
        %v884 = vpack.c.b16 %v873, %v872
        %v885 = vpack.c.b16 %v875, %v874
        %v886 = vpack.c.b16 %v877, %v876
        %v887 = vpack.c.b16 %v879, %v878
        %896 = vmatpush.bf16.msra.mxu0 %v887
        %897 = vmatpush.bf16.msra.mxu0 %v886
        %898 = vmatpush.bf16.msra.mxu0 %v885
        %899 = vmatpush.bf16.msra.mxu0 %v884
        %900 = vmatpush.bf16.msra.mxu0 %v883
        %901 = vmatpush.bf16.msra.mxu0 %v882
        %902 = vmatpush.bf16.msra.mxu0 %v881
        %903 = vmatpush.bf16.msra.mxu0 %v880
        %904 = vmatmul.bf16.gmra.mxu0 %v845
        %v905 = vpop.f32.mrf.mxu0
        %v906 = vadd.f32 0.0, %v905
        %v907 = vpop.f32.mrf.mxu0
        %908 = vdwg.mxu0
        %v909 = vadd.f32 %v826, %v906
        %s910 = scalar_lea.vmem [#allocation2], 128
        %v911 = vld [vmem:[%s910] sm:$0xf]
        %v912 = vld [vmem:[%s910 + $0x4] sm:$0xf]
        %v913 = vld [vmem:[%s910 + $0x8] sm:$0xf]
        %v914 = vld [vmem:[%s910 + $0xc] sm:$0xf]
        %v915 = vld [vmem:[%s910 + $0x10] sm:$0xf]
        %v916 = vld [vmem:[%s910 + $0x14] sm:$0xf]
        %v917 = vld [vmem:[%s910 + $0x18] sm:$0xf]
        %v918 = vld [vmem:[%s910 + $0x1c] sm:$0xf]
        %v919 = vld [vmem:[%s910 + $0x20] sm:$0xf]
        %v920 = vld [vmem:[%s910 + $0x24] sm:$0xf]
        %v921 = vld [vmem:[%s910 + $0x28] sm:$0xf]
        %v922 = vld [vmem:[%s910 + $0x2c] sm:$0xf]
        %v923 = vld [vmem:[%s910 + $0x30] sm:$0xf]
        %v924 = vld [vmem:[%s910 + $0x34] sm:$0xf]
        %v925 = vld [vmem:[%s910 + $0x38] sm:$0xf]
        %v926 = vld [vmem:[%s910 + $0x3c] sm:$0xf]
        %v928 = vrot.slane %v748, 1
        %v946 = vunpack.c.l.b16 %v911
        %v947 = vunpack.c.l.b16 %v912
        %v948 = vunpack.c.l.b16 %v913
        %v949 = vunpack.c.l.b16 %v914
        %v950 = vunpack.c.l.b16 %v915
        %v951 = vunpack.c.l.b16 %v916
        %v952 = vunpack.c.l.b16 %v917
        %v953 = vunpack.c.l.b16 %v918
        %v954 = vunpack.c.l.b16 %v919
        %v955 = vunpack.c.l.b16 %v920
        %v956 = vunpack.c.l.b16 %v921
        %v957 = vunpack.c.l.b16 %v922
        %v958 = vunpack.c.l.b16 %v923
        %v959 = vunpack.c.l.b16 %v924
        %v960 = vunpack.c.l.b16 %v925
        %v961 = vunpack.c.l.b16 %v926
        %v962 = vpack.c.b16 %v947, %v946
        %v963 = vpack.c.b16 %v949, %v948
        %v964 = vpack.c.b16 %v951, %v950
        %v965 = vpack.c.b16 %v953, %v952
        %v966 = vpack.c.b16 %v955, %v954
        %v967 = vpack.c.b16 %v957, %v956
        %v968 = vpack.c.b16 %v959, %v958
        %v969 = vpack.c.b16 %v961, %v960
        %978 = vmatpush.bf16.msra.mxu0 %v969
        %979 = vmatpush.bf16.msra.mxu0 %v968
        %980 = vmatpush.bf16.msra.mxu0 %v967
        %981 = vmatpush.bf16.msra.mxu0 %v966
        %982 = vmatpush.bf16.msra.mxu0 %v965
        %983 = vmatpush.bf16.msra.mxu0 %v964
        %984 = vmatpush.bf16.msra.mxu0 %v963
        %985 = vmatpush.bf16.msra.mxu0 %v962
        %986 = vmatmul.bf16.gmra.mxu0 %v928
        %v987 = vpop.f32.mrf.mxu0
        %v988 = vadd.f32 0.0, %v987
        %v989 = vpop.f32.mrf.mxu0
        %990 = vdwg.mxu0
        %v991 = vadd.f32 %v909, %v988
        %s992 = scalar_lea.vmem [#allocation2], 192
        %v993 = vld [vmem:[%s992] sm:$0xf]
        %v994 = vld [vmem:[%s992 + $0x4] sm:$0xf]
        %v995 = vld [vmem:[%s992 + $0x8] sm:$0xf]
        %v996 = vld [vmem:[%s992 + $0xc] sm:$0xf]
        %v997 = vld [vmem:[%s992 + $0x10] sm:$0xf]
        %v998 = vld [vmem:[%s992 + $0x14] sm:$0xf]
        %v999 = vld [vmem:[%s992 + $0x18] sm:$0xf]
        %v1000 = vld [vmem:[%s992 + $0x1c] sm:$0xf]
        %v1001 = vld [vmem:[%s992 + $0x20] sm:$0xf]
        %v1002 = vld [vmem:[%s992 + $0x24] sm:$0xf]
        %v1003 = vld [vmem:[%s992 + $0x28] sm:$0xf]
        %v1004 = vld [vmem:[%s992 + $0x2c] sm:$0xf]
        %v1005 = vld [vmem:[%s992 + $0x30] sm:$0xf]
        %v1006 = vld [vmem:[%s992 + $0x34] sm:$0xf]
        %v1007 = vld [vmem:[%s992 + $0x38] sm:$0xf]
        %v1008 = vld [vmem:[%s992 + $0x3c] sm:$0xf]
        %v1009 = vrot.slane %v845, 1
        %v1027 = vunpack.c.l.b16 %v993
        %v1028 = vunpack.c.l.b16 %v994
        %v1029 = vunpack.c.l.b16 %v995
        %v1030 = vunpack.c.l.b16 %v996
        %v1031 = vunpack.c.l.b16 %v997
        %v1032 = vunpack.c.l.b16 %v998
        %v1033 = vunpack.c.l.b16 %v999
        %v1034 = vunpack.c.l.b16 %v1000
        %v1035 = vunpack.c.l.b16 %v1001
        %v1036 = vunpack.c.l.b16 %v1002
        %v1037 = vunpack.c.l.b16 %v1003
        %v1038 = vunpack.c.l.b16 %v1004
        %v1039 = vunpack.c.l.b16 %v1005
        %v1040 = vunpack.c.l.b16 %v1006
        %v1041 = vunpack.c.l.b16 %v1007
        %v1042 = vunpack.c.l.b16 %v1008
        %v1043 = vpack.c.b16 %v1028, %v1027
        %v1044 = vpack.c.b16 %v1030, %v1029
        %v1045 = vpack.c.b16 %v1032, %v1031
        %v1046 = vpack.c.b16 %v1034, %v1033
        %v1047 = vpack.c.b16 %v1036, %v1035
        %v1048 = vpack.c.b16 %v1038, %v1037
        %v1049 = vpack.c.b16 %v1040, %v1039
        %v1050 = vpack.c.b16 %v1042, %v1041
        %1059 = vmatpush.bf16.msra.mxu0 %v1050
        %1060 = vmatpush.bf16.msra.mxu0 %v1049
        %1061 = vmatpush.bf16.msra.mxu0 %v1048
        %1062 = vmatpush.bf16.msra.mxu0 %v1047
        %1063 = vmatpush.bf16.msra.mxu0 %v1046
        %1064 = vmatpush.bf16.msra.mxu0 %v1045
        %1065 = vmatpush.bf16.msra.mxu0 %v1044
        %1066 = vmatpush.bf16.msra.mxu0 %v1043
        %1067 = vmatmul.bf16.gmra.mxu0 %v1009
        %v1068 = vpop.f32.mrf.mxu0
        %v1069 = vadd.f32 0.0, %v1068
        %v1070 = vpop.f32.mrf.mxu0
        %1071 = vdwg.mxu0
        %v1072 = vadd.f32 %v991, %v1069
        %s1073 = scalar_lea.vmem [#allocation2], 256
        %v1074 = vld [vmem:[%s1073] sm:$0xf]
        %v1075 = vld [vmem:[%s1073 + $0x4] sm:$0xf]
        %v1076 = vld [vmem:[%s1073 + $0x8] sm:$0xf]
        %v1077 = vld [vmem:[%s1073 + $0xc] sm:$0xf]
        %v1078 = vld [vmem:[%s1073 + $0x10] sm:$0xf]
        %v1079 = vld [vmem:[%s1073 + $0x14] sm:$0xf]
        %v1080 = vld [vmem:[%s1073 + $0x18] sm:$0xf]
        %v1081 = vld [vmem:[%s1073 + $0x1c] sm:$0xf]
        %v1082 = vld [vmem:[%s1073 + $0x20] sm:$0xf]
        %v1083 = vld [vmem:[%s1073 + $0x24] sm:$0xf]
        %v1084 = vld [vmem:[%s1073 + $0x28] sm:$0xf]
        %v1085 = vld [vmem:[%s1073 + $0x2c] sm:$0xf]
        %v1086 = vld [vmem:[%s1073 + $0x30] sm:$0xf]
        %v1087 = vld [vmem:[%s1073 + $0x34] sm:$0xf]
        %v1088 = vld [vmem:[%s1073 + $0x38] sm:$0xf]
        %v1089 = vld [vmem:[%s1073 + $0x3c] sm:$0xf]
        %v1090 = vrot.slane %v748, 2
        %v1108 = vunpack.c.l.b16 %v1074
        %v1109 = vunpack.c.l.b16 %v1075
        %v1110 = vunpack.c.l.b16 %v1076
        %v1111 = vunpack.c.l.b16 %v1077
        %v1112 = vunpack.c.l.b16 %v1078
        %v1113 = vunpack.c.l.b16 %v1079
        %v1114 = vunpack.c.l.b16 %v1080
        %v1115 = vunpack.c.l.b16 %v1081
        %v1116 = vunpack.c.l.b16 %v1082
        %v1117 = vunpack.c.l.b16 %v1083
        %v1118 = vunpack.c.l.b16 %v1084
        %v1119 = vunpack.c.l.b16 %v1085
        %v1120 = vunpack.c.l.b16 %v1086
        %v1121 = vunpack.c.l.b16 %v1087
        %v1122 = vunpack.c.l.b16 %v1088
        %v1123 = vunpack.c.l.b16 %v1089
        %v1124 = vpack.c.b16 %v1109, %v1108
        %v1125 = vpack.c.b16 %v1111, %v1110
        %v1126 = vpack.c.b16 %v1113, %v1112
        %v1127 = vpack.c.b16 %v1115, %v1114
        %v1128 = vpack.c.b16 %v1117, %v1116
        %v1129 = vpack.c.b16 %v1119, %v1118
        %v1130 = vpack.c.b16 %v1121, %v1120
        %v1131 = vpack.c.b16 %v1123, %v1122
        %1140 = vmatpush.bf16.msra.mxu0 %v1131
        %1141 = vmatpush.bf16.msra.mxu0 %v1130
        %1142 = vmatpush.bf16.msra.mxu0 %v1129
        %1143 = vmatpush.bf16.msra.mxu0 %v1128
        %1144 = vmatpush.bf16.msra.mxu0 %v1127
        %1145 = vmatpush.bf16.msra.mxu0 %v1126
        %1146 = vmatpush.bf16.msra.mxu0 %v1125
        %1147 = vmatpush.bf16.msra.mxu0 %v1124
        %1148 = vmatmul.bf16.gmra.mxu0 %v1090
        %v1149 = vpop.f32.mrf.mxu0
        %v1150 = vadd.f32 0.0, %v1149
        %v1151 = vpop.f32.mrf.mxu0
        %1152 = vdwg.mxu0
        %v1153 = vadd.f32 %v1072, %v1150
        %s1154 = scalar_lea.vmem [#allocation2], 320
        %v1155 = vld [vmem:[%s1154] sm:$0xf]
        %v1156 = vld [vmem:[%s1154 + $0x4] sm:$0xf]
        %v1157 = vld [vmem:[%s1154 + $0x8] sm:$0xf]
        %v1158 = vld [vmem:[%s1154 + $0xc] sm:$0xf]
        %v1159 = vld [vmem:[%s1154 + $0x10] sm:$0xf]
        %v1160 = vld [vmem:[%s1154 + $0x14] sm:$0xf]
        %v1161 = vld [vmem:[%s1154 + $0x18] sm:$0xf]
        %v1162 = vld [vmem:[%s1154 + $0x1c] sm:$0xf]
        %v1163 = vld [vmem:[%s1154 + $0x20] sm:$0xf]
        %v1164 = vld [vmem:[%s1154 + $0x24] sm:$0xf]
        %v1165 = vld [vmem:[%s1154 + $0x28] sm:$0xf]
        %v1166 = vld [vmem:[%s1154 + $0x2c] sm:$0xf]
        %v1167 = vld [vmem:[%s1154 + $0x30] sm:$0xf]
        %v1168 = vld [vmem:[%s1154 + $0x34] sm:$0xf]
        %v1169 = vld [vmem:[%s1154 + $0x38] sm:$0xf]
        %v1170 = vld [vmem:[%s1154 + $0x3c] sm:$0xf]
        %v1171 = vrot.slane %v845, 2
        %v1189 = vunpack.c.l.b16 %v1155
        %v1190 = vunpack.c.l.b16 %v1156
        %v1191 = vunpack.c.l.b16 %v1157
        %v1192 = vunpack.c.l.b16 %v1158
        %v1193 = vunpack.c.l.b16 %v1159
        %v1194 = vunpack.c.l.b16 %v1160
        %v1195 = vunpack.c.l.b16 %v1161
        %v1196 = vunpack.c.l.b16 %v1162
        %v1197 = vunpack.c.l.b16 %v1163
        %v1198 = vunpack.c.l.b16 %v1164
        %v1199 = vunpack.c.l.b16 %v1165
        %v1200 = vunpack.c.l.b16 %v1166
        %v1201 = vunpack.c.l.b16 %v1167
        %v1202 = vunpack.c.l.b16 %v1168
        %v1203 = vunpack.c.l.b16 %v1169
        %v1204 = vunpack.c.l.b16 %v1170
        %v1205 = vpack.c.b16 %v1190, %v1189
        %v1206 = vpack.c.b16 %v1192, %v1191
        %v1207 = vpack.c.b16 %v1194, %v1193
        %v1208 = vpack.c.b16 %v1196, %v1195
        %v1209 = vpack.c.b16 %v1198, %v1197
        %v1210 = vpack.c.b16 %v1200, %v1199
        %v1211 = vpack.c.b16 %v1202, %v1201
        %v1212 = vpack.c.b16 %v1204, %v1203
        %1221 = vmatpush.bf16.msra.mxu0 %v1212
        %1222 = vmatpush.bf16.msra.mxu0 %v1211
        %1223 = vmatpush.bf16.msra.mxu0 %v1210
        %1224 = vmatpush.bf16.msra.mxu0 %v1209
        %1225 = vmatpush.bf16.msra.mxu0 %v1208
        %1226 = vmatpush.bf16.msra.mxu0 %v1207
        %1227 = vmatpush.bf16.msra.mxu0 %v1206
        %1228 = vmatpush.bf16.msra.mxu0 %v1205
        %1229 = vmatmul.bf16.gmra.mxu0 %v1171
        %v1230 = vpop.f32.mrf.mxu0
        %v1231 = vadd.f32 0.0, %v1230
        %v1232 = vpop.f32.mrf.mxu0
        %1233 = vdwg.mxu0
        %v1234 = vadd.f32 %v1153, %v1231
        %s1235 = scalar_lea.vmem [#allocation2], 384
        %v1236 = vld [vmem:[%s1235] sm:$0xf]
        %v1237 = vld [vmem:[%s1235 + $0x4] sm:$0xf]
        %v1238 = vld [vmem:[%s1235 + $0x8] sm:$0xf]
        %v1239 = vld [vmem:[%s1235 + $0xc] sm:$0xf]
        %v1240 = vld [vmem:[%s1235 + $0x10] sm:$0xf]
        %v1241 = vld [vmem:[%s1235 + $0x14] sm:$0xf]
        %v1242 = vld [vmem:[%s1235 + $0x18] sm:$0xf]
        %v1243 = vld [vmem:[%s1235 + $0x1c] sm:$0xf]
        %v1244 = vld [vmem:[%s1235 + $0x20] sm:$0xf]
        %v1245 = vld [vmem:[%s1235 + $0x24] sm:$0xf]
        %v1246 = vld [vmem:[%s1235 + $0x28] sm:$0xf]
        %v1247 = vld [vmem:[%s1235 + $0x2c] sm:$0xf]
        %v1248 = vld [vmem:[%s1235 + $0x30] sm:$0xf]
        %v1249 = vld [vmem:[%s1235 + $0x34] sm:$0xf]
        %v1250 = vld [vmem:[%s1235 + $0x38] sm:$0xf]
        %v1251 = vld [vmem:[%s1235 + $0x3c] sm:$0xf]
        %v1252 = vrot.slane %v748, 3
        %v1270 = vunpack.c.l.b16 %v1236
        %v1271 = vunpack.c.l.b16 %v1237
        %v1272 = vunpack.c.l.b16 %v1238
        %v1273 = vunpack.c.l.b16 %v1239
        %v1274 = vunpack.c.l.b16 %v1240
        %v1275 = vunpack.c.l.b16 %v1241
        %v1276 = vunpack.c.l.b16 %v1242
        %v1277 = vunpack.c.l.b16 %v1243
        %v1278 = vunpack.c.l.b16 %v1244
        %v1279 = vunpack.c.l.b16 %v1245
        %v1280 = vunpack.c.l.b16 %v1246
        %v1281 = vunpack.c.l.b16 %v1247
        %v1282 = vunpack.c.l.b16 %v1248
        %v1283 = vunpack.c.l.b16 %v1249
        %v1284 = vunpack.c.l.b16 %v1250
        %v1285 = vunpack.c.l.b16 %v1251
        %v1286 = vpack.c.b16 %v1271, %v1270
        %v1287 = vpack.c.b16 %v1273, %v1272
        %v1288 = vpack.c.b16 %v1275, %v1274
        %v1289 = vpack.c.b16 %v1277, %v1276
        %v1290 = vpack.c.b16 %v1279, %v1278
        %v1291 = vpack.c.b16 %v1281, %v1280
        %v1292 = vpack.c.b16 %v1283, %v1282
        %v1293 = vpack.c.b16 %v1285, %v1284
        %1302 = vmatpush.bf16.msra.mxu0 %v1293
        %1303 = vmatpush.bf16.msra.mxu0 %v1292
        %1304 = vmatpush.bf16.msra.mxu0 %v1291
        %1305 = vmatpush.bf16.msra.mxu0 %v1290
        %1306 = vmatpush.bf16.msra.mxu0 %v1289
        %1307 = vmatpush.bf16.msra.mxu0 %v1288
        %1308 = vmatpush.bf16.msra.mxu0 %v1287
        %1309 = vmatpush.bf16.msra.mxu0 %v1286
        %1310 = vmatmul.bf16.gmra.mxu0 %v1252
        %v1311 = vpop.f32.mrf.mxu0
        %v1312 = vadd.f32 0.0, %v1311
        %v1313 = vpop.f32.mrf.mxu0
        %1314 = vdwg.mxu0
        %v1315 = vadd.f32 %v1234, %v1312
        %s1316 = scalar_lea.vmem [#allocation2], 448
        %v1317 = vld [vmem:[%s1316] sm:$0xf]
        %v1318 = vld [vmem:[%s1316 + $0x4] sm:$0xf]
        %v1319 = vld [vmem:[%s1316 + $0x8] sm:$0xf]
        %v1320 = vld [vmem:[%s1316 + $0xc] sm:$0xf]
        %v1321 = vld [vmem:[%s1316 + $0x10] sm:$0xf]
        %v1322 = vld [vmem:[%s1316 + $0x14] sm:$0xf]
        %v1323 = vld [vmem:[%s1316 + $0x18] sm:$0xf]
        %v1324 = vld [vmem:[%s1316 + $0x1c] sm:$0xf]
        %v1325 = vld [vmem:[%s1316 + $0x20] sm:$0xf]
        %v1326 = vld [vmem:[%s1316 + $0x24] sm:$0xf]
        %v1327 = vld [vmem:[%s1316 + $0x28] sm:$0xf]
        %v1328 = vld [vmem:[%s1316 + $0x2c] sm:$0xf]
        %v1329 = vld [vmem:[%s1316 + $0x30] sm:$0xf]
        %v1330 = vld [vmem:[%s1316 + $0x34] sm:$0xf]
        %v1331 = vld [vmem:[%s1316 + $0x38] sm:$0xf]
        %v1332 = vld [vmem:[%s1316 + $0x3c] sm:$0xf]
        %v1333 = vrot.slane %v845, 3
        %v1351 = vunpack.c.l.b16 %v1317
        %v1352 = vunpack.c.l.b16 %v1318
        %v1353 = vunpack.c.l.b16 %v1319
        %v1354 = vunpack.c.l.b16 %v1320
        %v1355 = vunpack.c.l.b16 %v1321
        %v1356 = vunpack.c.l.b16 %v1322
        %v1357 = vunpack.c.l.b16 %v1323
        %v1358 = vunpack.c.l.b16 %v1324
        %v1359 = vunpack.c.l.b16 %v1325
        %v1360 = vunpack.c.l.b16 %v1326
        %v1361 = vunpack.c.l.b16 %v1327
        %v1362 = vunpack.c.l.b16 %v1328
        %v1363 = vunpack.c.l.b16 %v1329
        %v1364 = vunpack.c.l.b16 %v1330
        %v1365 = vunpack.c.l.b16 %v1331
        %v1366 = vunpack.c.l.b16 %v1332
        %v1367 = vpack.c.b16 %v1352, %v1351
        %v1368 = vpack.c.b16 %v1354, %v1353
        %v1369 = vpack.c.b16 %v1356, %v1355
        %v1370 = vpack.c.b16 %v1358, %v1357
        %v1371 = vpack.c.b16 %v1360, %v1359
        %v1372 = vpack.c.b16 %v1362, %v1361
        %v1373 = vpack.c.b16 %v1364, %v1363
        %v1374 = vpack.c.b16 %v1366, %v1365
        %1383 = vmatpush.bf16.msra.mxu0 %v1374
        %1384 = vmatpush.bf16.msra.mxu0 %v1373
        %1385 = vmatpush.bf16.msra.mxu0 %v1372
        %1386 = vmatpush.bf16.msra.mxu0 %v1371
        %1387 = vmatpush.bf16.msra.mxu0 %v1370
        %1388 = vmatpush.bf16.msra.mxu0 %v1369
        %1389 = vmatpush.bf16.msra.mxu0 %v1368
        %1390 = vmatpush.bf16.msra.mxu0 %v1367
        %1391 = vmatmul.bf16.gmra.mxu0 %v1333
        %v1392 = vpop.f32.mrf.mxu0
        %v1393 = vadd.f32 0.0, %v1392
        %v1394 = vpop.f32.mrf.mxu0
        %1395 = vdwg.mxu0
        %v1396 = vadd.f32 %v1315, %v1393
        %v1397 = vpack.c.bf16 %v746, %v746
        %s1398 = scalar_lea.vmem [#allocation2], 512
        %v1399 = vld [vmem:[%s1398] sm:$0xf]
        %v1400 = vld [vmem:[%s1398 + $0x4] sm:$0xf]
        %v1401 = vld [vmem:[%s1398 + $0x8] sm:$0xf]
        %v1402 = vld [vmem:[%s1398 + $0xc] sm:$0xf]
        %v1403 = vld [vmem:[%s1398 + $0x10] sm:$0xf]
        %v1404 = vld [vmem:[%s1398 + $0x14] sm:$0xf]
        %v1405 = vld [vmem:[%s1398 + $0x18] sm:$0xf]
        %v1406 = vld [vmem:[%s1398 + $0x1c] sm:$0xf]
        %v1407 = vld [vmem:[%s1398 + $0x20] sm:$0xf]
        %v1408 = vld [vmem:[%s1398 + $0x24] sm:$0xf]
        %v1409 = vld [vmem:[%s1398 + $0x28] sm:$0xf]
        %v1410 = vld [vmem:[%s1398 + $0x2c] sm:$0xf]
        %v1411 = vld [vmem:[%s1398 + $0x30] sm:$0xf]
        %v1412 = vld [vmem:[%s1398 + $0x34] sm:$0xf]
        %v1413 = vld [vmem:[%s1398 + $0x38] sm:$0xf]
        %v1414 = vld [vmem:[%s1398 + $0x3c] sm:$0xf]
        %v1431 = vunpack.c.l.b16 %v1399
        %v1432 = vunpack.c.l.b16 %v1400
        %v1433 = vunpack.c.l.b16 %v1401
        %v1434 = vunpack.c.l.b16 %v1402
        %v1435 = vunpack.c.l.b16 %v1403
        %v1436 = vunpack.c.l.b16 %v1404
        %v1437 = vunpack.c.l.b16 %v1405
        %v1438 = vunpack.c.l.b16 %v1406
        %v1439 = vunpack.c.l.b16 %v1407
        %v1440 = vunpack.c.l.b16 %v1408
        %v1441 = vunpack.c.l.b16 %v1409
        %v1442 = vunpack.c.l.b16 %v1410
        %v1443 = vunpack.c.l.b16 %v1411
        %v1444 = vunpack.c.l.b16 %v1412
        %v1445 = vunpack.c.l.b16 %v1413
        %v1446 = vunpack.c.l.b16 %v1414
        %v1447 = vpack.c.b16 %v1432, %v1431
        %v1448 = vpack.c.b16 %v1434, %v1433
        %v1449 = vpack.c.b16 %v1436, %v1435
        %v1450 = vpack.c.b16 %v1438, %v1437
        %v1451 = vpack.c.b16 %v1440, %v1439
        %v1452 = vpack.c.b16 %v1442, %v1441
        %v1453 = vpack.c.b16 %v1444, %v1443
        %v1454 = vpack.c.b16 %v1446, %v1445
        %1463 = vmatpush.bf16.msra.mxu0 %v1454
        %1464 = vmatpush.bf16.msra.mxu0 %v1453
        %1465 = vmatpush.bf16.msra.mxu0 %v1452
        %1466 = vmatpush.bf16.msra.mxu0 %v1451
        %1467 = vmatpush.bf16.msra.mxu0 %v1450
        %1468 = vmatpush.bf16.msra.mxu0 %v1449
        %1469 = vmatpush.bf16.msra.mxu0 %v1448
        %1470 = vmatpush.bf16.msra.mxu0 %v1447
        %1471 = vmatmul.bf16.gmra.mxu0 %v1397
        %v1472 = vpop.f32.mrf.mxu0
        %v1473 = vadd.f32 0.0, %v1472
        %v1474 = vpop.f32.mrf.mxu0
        %1475 = vdwg.mxu0
        %v1476 = vadd.f32 %v1396, %v1473
        %s1477 = scalar_lea.vmem [#allocation2], 576
        %v1478 = vld [vmem:[%s1477] sm:$0xf]
        %v1479 = vld [vmem:[%s1477 + $0x4] sm:$0xf]
        %v1480 = vld [vmem:[%s1477 + $0x8] sm:$0xf]
        %v1481 = vld [vmem:[%s1477 + $0xc] sm:$0xf]
        %v1482 = vld [vmem:[%s1477 + $0x10] sm:$0xf]
        %v1483 = vld [vmem:[%s1477 + $0x14] sm:$0xf]
        %v1484 = vld [vmem:[%s1477 + $0x18] sm:$0xf]
        %v1485 = vld [vmem:[%s1477 + $0x1c] sm:$0xf]
        %v1486 = vld [vmem:[%s1477 + $0x20] sm:$0xf]
        %v1487 = vld [vmem:[%s1477 + $0x24] sm:$0xf]
        %v1488 = vld [vmem:[%s1477 + $0x28] sm:$0xf]
        %v1489 = vld [vmem:[%s1477 + $0x2c] sm:$0xf]
        %v1490 = vld [vmem:[%s1477 + $0x30] sm:$0xf]
        %v1491 = vld [vmem:[%s1477 + $0x34] sm:$0xf]
        %v1492 = vld [vmem:[%s1477 + $0x38] sm:$0xf]
        %v1493 = vld [vmem:[%s1477 + $0x3c] sm:$0xf]
        %v1495 = vshrl.u32 %v1397, 16
        %v1514 = vunpack.c.l.b16 %v1478
        %v1515 = vunpack.c.l.b16 %v1479
        %v1516 = vunpack.c.l.b16 %v1480
        %v1517 = vunpack.c.l.b16 %v1481
        %v1518 = vunpack.c.l.b16 %v1482
        %v1519 = vunpack.c.l.b16 %v1483
        %v1520 = vunpack.c.l.b16 %v1484
        %v1521 = vunpack.c.l.b16 %v1485
        %v1522 = vunpack.c.l.b16 %v1486
        %v1523 = vunpack.c.l.b16 %v1487
        %v1524 = vunpack.c.l.b16 %v1488
        %v1525 = vunpack.c.l.b16 %v1489
        %v1526 = vunpack.c.l.b16 %v1490
        %v1527 = vunpack.c.l.b16 %v1491
        %v1528 = vunpack.c.l.b16 %v1492
        %v1529 = vunpack.c.l.b16 %v1493
        %v1530 = vpack.c.b16 %v1515, %v1514
        %v1531 = vpack.c.b16 %v1517, %v1516
        %v1532 = vpack.c.b16 %v1519, %v1518
        %v1533 = vpack.c.b16 %v1521, %v1520
        %v1534 = vpack.c.b16 %v1523, %v1522
        %v1535 = vpack.c.b16 %v1525, %v1524
        %v1536 = vpack.c.b16 %v1527, %v1526
        %v1537 = vpack.c.b16 %v1529, %v1528
        %1546 = vmatpush.bf16.msra.mxu0 %v1537
        %1547 = vmatpush.bf16.msra.mxu0 %v1536
        %1548 = vmatpush.bf16.msra.mxu0 %v1535
        %1549 = vmatpush.bf16.msra.mxu0 %v1534
        %1550 = vmatpush.bf16.msra.mxu0 %v1533
        %1551 = vmatpush.bf16.msra.mxu0 %v1532
        %1552 = vmatpush.bf16.msra.mxu0 %v1531
        %1553 = vmatpush.bf16.msra.mxu0 %v1530
        %1554 = vmatmul.bf16.gmra.mxu0 %v1495
        %v1555 = vpop.f32.mrf.mxu0
        %v1556 = vadd.f32 0.0, %v1555
        %v1557 = vpop.f32.mrf.mxu0
        %1558 = vdwg.mxu0
        %v1559 = vadd.f32 %v1476, %v1556
        %s1560 = scalar_lea.vmem [#allocation2], 640
        %v1561 = vld [vmem:[%s1560] sm:$0xf]
        %v1562 = vld [vmem:[%s1560 + $0x4] sm:$0xf]
        %v1563 = vld [vmem:[%s1560 + $0x8] sm:$0xf]
        %v1564 = vld [vmem:[%s1560 + $0xc] sm:$0xf]
        %v1565 = vld [vmem:[%s1560 + $0x10] sm:$0xf]
        %v1566 = vld [vmem:[%s1560 + $0x14] sm:$0xf]
        %v1567 = vld [vmem:[%s1560 + $0x18] sm:$0xf]
        %v1568 = vld [vmem:[%s1560 + $0x1c] sm:$0xf]
        %v1569 = vld [vmem:[%s1560 + $0x20] sm:$0xf]
        %v1570 = vld [vmem:[%s1560 + $0x24] sm:$0xf]
        %v1571 = vld [vmem:[%s1560 + $0x28] sm:$0xf]
        %v1572 = vld [vmem:[%s1560 + $0x2c] sm:$0xf]
        %v1573 = vld [vmem:[%s1560 + $0x30] sm:$0xf]
        %v1574 = vld [vmem:[%s1560 + $0x34] sm:$0xf]
        %v1575 = vld [vmem:[%s1560 + $0x38] sm:$0xf]
        %v1576 = vld [vmem:[%s1560 + $0x3c] sm:$0xf]
        %v1578 = vrot.slane %v1397, 1
        %v1596 = vunpack.c.l.b16 %v1561
        %v1597 = vunpack.c.l.b16 %v1562
        %v1598 = vunpack.c.l.b16 %v1563
        %v1599 = vunpack.c.l.b16 %v1564
        %v1600 = vunpack.c.l.b16 %v1565
        %v1601 = vunpack.c.l.b16 %v1566
        %v1602 = vunpack.c.l.b16 %v1567
        %v1603 = vunpack.c.l.b16 %v1568
        %v1604 = vunpack.c.l.b16 %v1569
        %v1605 = vunpack.c.l.b16 %v1570
        %v1606 = vunpack.c.l.b16 %v1571
        %v1607 = vunpack.c.l.b16 %v1572
        %v1608 = vunpack.c.l.b16 %v1573
        %v1609 = vunpack.c.l.b16 %v1574
        %v1610 = vunpack.c.l.b16 %v1575
        %v1611 = vunpack.c.l.b16 %v1576
        %v1612 = vpack.c.b16 %v1597, %v1596
        %v1613 = vpack.c.b16 %v1599, %v1598
        %v1614 = vpack.c.b16 %v1601, %v1600
        %v1615 = vpack.c.b16 %v1603, %v1602
        %v1616 = vpack.c.b16 %v1605, %v1604
        %v1617 = vpack.c.b16 %v1607, %v1606
        %v1618 = vpack.c.b16 %v1609, %v1608
        %v1619 = vpack.c.b16 %v1611, %v1610
        %1628 = vmatpush.bf16.msra.mxu0 %v1619
        %1629 = vmatpush.bf16.msra.mxu0 %v1618
        %1630 = vmatpush.bf16.msra.mxu0 %v1617
        %1631 = vmatpush.bf16.msra.mxu0 %v1616
        %1632 = vmatpush.bf16.msra.mxu0 %v1615
        %1633 = vmatpush.bf16.msra.mxu0 %v1614
        %1634 = vmatpush.bf16.msra.mxu0 %v1613
        %1635 = vmatpush.bf16.msra.mxu0 %v1612
        %1636 = vmatmul.bf16.gmra.mxu0 %v1578
        %v1637 = vpop.f32.mrf.mxu0
        %v1638 = vadd.f32 0.0, %v1637
        %v1639 = vpop.f32.mrf.mxu0
        %1640 = vdwg.mxu0
        %v1641 = vadd.f32 %v1559, %v1638
        %s1642 = scalar_lea.vmem [#allocation2], 704
        %v1643 = vld [vmem:[%s1642] sm:$0xf]
        %v1644 = vld [vmem:[%s1642 + $0x4] sm:$0xf]
        %v1645 = vld [vmem:[%s1642 + $0x8] sm:$0xf]
        %v1646 = vld [vmem:[%s1642 + $0xc] sm:$0xf]
        %v1647 = vld [vmem:[%s1642 + $0x10] sm:$0xf]
        %v1648 = vld [vmem:[%s1642 + $0x14] sm:$0xf]
        %v1649 = vld [vmem:[%s1642 + $0x18] sm:$0xf]
        %v1650 = vld [vmem:[%s1642 + $0x1c] sm:$0xf]
        %v1651 = vld [vmem:[%s1642 + $0x20] sm:$0xf]
        %v1652 = vld [vmem:[%s1642 + $0x24] sm:$0xf]
        %v1653 = vld [vmem:[%s1642 + $0x28] sm:$0xf]
        %v1654 = vld [vmem:[%s1642 + $0x2c] sm:$0xf]
        %v1655 = vld [vmem:[%s1642 + $0x30] sm:$0xf]
        %v1656 = vld [vmem:[%s1642 + $0x34] sm:$0xf]
        %v1657 = vld [vmem:[%s1642 + $0x38] sm:$0xf]
        %v1658 = vld [vmem:[%s1642 + $0x3c] sm:$0xf]
        %v1659 = vrot.slane %v1495, 1
        %v1677 = vunpack.c.l.b16 %v1643
        %v1678 = vunpack.c.l.b16 %v1644
        %v1679 = vunpack.c.l.b16 %v1645
        %v1680 = vunpack.c.l.b16 %v1646
        %v1681 = vunpack.c.l.b16 %v1647
        %v1682 = vunpack.c.l.b16 %v1648
        %v1683 = vunpack.c.l.b16 %v1649
        %v1684 = vunpack.c.l.b16 %v1650
        %v1685 = vunpack.c.l.b16 %v1651
        %v1686 = vunpack.c.l.b16 %v1652
        %v1687 = vunpack.c.l.b16 %v1653
        %v1688 = vunpack.c.l.b16 %v1654
        %v1689 = vunpack.c.l.b16 %v1655
        %v1690 = vunpack.c.l.b16 %v1656
        %v1691 = vunpack.c.l.b16 %v1657
        %v1692 = vunpack.c.l.b16 %v1658
        %v1693 = vpack.c.b16 %v1678, %v1677
        %v1694 = vpack.c.b16 %v1680, %v1679
        %v1695 = vpack.c.b16 %v1682, %v1681
        %v1696 = vpack.c.b16 %v1684, %v1683
        %v1697 = vpack.c.b16 %v1686, %v1685
        %v1698 = vpack.c.b16 %v1688, %v1687
        %v1699 = vpack.c.b16 %v1690, %v1689
        %v1700 = vpack.c.b16 %v1692, %v1691
        %1709 = vmatpush.bf16.msra.mxu0 %v1700
        %1710 = vmatpush.bf16.msra.mxu0 %v1699
        %1711 = vmatpush.bf16.msra.mxu0 %v1698
        %1712 = vmatpush.bf16.msra.mxu0 %v1697
        %1713 = vmatpush.bf16.msra.mxu0 %v1696
        %1714 = vmatpush.bf16.msra.mxu0 %v1695
        %1715 = vmatpush.bf16.msra.mxu0 %v1694
        %1716 = vmatpush.bf16.msra.mxu0 %v1693
        %1717 = vmatmul.bf16.gmra.mxu0 %v1659
        %v1718 = vpop.f32.mrf.mxu0
        %v1719 = vadd.f32 0.0, %v1718
        %v1720 = vpop.f32.mrf.mxu0
        %1721 = vdwg.mxu0
        %v1722 = vadd.f32 %v1641, %v1719
        %s1723 = scalar_lea.vmem [#allocation2], 768
        %v1724 = vld [vmem:[%s1723] sm:$0xf]
        %v1725 = vld [vmem:[%s1723 + $0x4] sm:$0xf]
        %v1726 = vld [vmem:[%s1723 + $0x8] sm:$0xf]
        %v1727 = vld [vmem:[%s1723 + $0xc] sm:$0xf]
        %v1728 = vld [vmem:[%s1723 + $0x10] sm:$0xf]
        %v1729 = vld [vmem:[%s1723 + $0x14] sm:$0xf]
        %v1730 = vld [vmem:[%s1723 + $0x18] sm:$0xf]
        %v1731 = vld [vmem:[%s1723 + $0x1c] sm:$0xf]
        %v1732 = vld [vmem:[%s1723 + $0x20] sm:$0xf]
        %v1733 = vld [vmem:[%s1723 + $0x24] sm:$0xf]
        %v1734 = vld [vmem:[%s1723 + $0x28] sm:$0xf]
        %v1735 = vld [vmem:[%s1723 + $0x2c] sm:$0xf]
        %v1736 = vld [vmem:[%s1723 + $0x30] sm:$0xf]
        %v1737 = vld [vmem:[%s1723 + $0x34] sm:$0xf]
        %v1738 = vld [vmem:[%s1723 + $0x38] sm:$0xf]
        %v1739 = vld [vmem:[%s1723 + $0x3c] sm:$0xf]
        %v1740 = vrot.slane %v1397, 2
        %v1758 = vunpack.c.l.b16 %v1724
        %v1759 = vunpack.c.l.b16 %v1725
        %v1760 = vunpack.c.l.b16 %v1726
        %v1761 = vunpack.c.l.b16 %v1727
        %v1762 = vunpack.c.l.b16 %v1728
        %v1763 = vunpack.c.l.b16 %v1729
        %v1764 = vunpack.c.l.b16 %v1730
        %v1765 = vunpack.c.l.b16 %v1731
        %v1766 = vunpack.c.l.b16 %v1732
        %v1767 = vunpack.c.l.b16 %v1733
        %v1768 = vunpack.c.l.b16 %v1734
        %v1769 = vunpack.c.l.b16 %v1735
        %v1770 = vunpack.c.l.b16 %v1736
        %v1771 = vunpack.c.l.b16 %v1737
        %v1772 = vunpack.c.l.b16 %v1738
        %v1773 = vunpack.c.l.b16 %v1739
        %v1774 = vpack.c.b16 %v1759, %v1758
        %v1775 = vpack.c.b16 %v1761, %v1760
        %v1776 = vpack.c.b16 %v1763, %v1762
        %v1777 = vpack.c.b16 %v1765, %v1764
        %v1778 = vpack.c.b16 %v1767, %v1766
        %v1779 = vpack.c.b16 %v1769, %v1768
        %v1780 = vpack.c.b16 %v1771, %v1770
        %v1781 = vpack.c.b16 %v1773, %v1772
        %1790 = vmatpush.bf16.msra.mxu0 %v1781
        %1791 = vmatpush.bf16.msra.mxu0 %v1780
        %1792 = vmatpush.bf16.msra.mxu0 %v1779
        %1793 = vmatpush.bf16.msra.mxu0 %v1778
        %1794 = vmatpush.bf16.msra.mxu0 %v1777
        %1795 = vmatpush.bf16.msra.mxu0 %v1776
        %1796 = vmatpush.bf16.msra.mxu0 %v1775
        %1797 = vmatpush.bf16.msra.mxu0 %v1774
        %1798 = vmatmul.bf16.gmra.mxu0 %v1740
        %v1799 = vpop.f32.mrf.mxu0
        %v1800 = vadd.f32 0.0, %v1799
        %v1801 = vpop.f32.mrf.mxu0
        %1802 = vdwg.mxu0
        %v1803 = vadd.f32 %v1722, %v1800
        %s1804 = scalar_lea.vmem [#allocation2], 832
        %v1805 = vld [vmem:[%s1804] sm:$0xf]
        %v1806 = vld [vmem:[%s1804 + $0x4] sm:$0xf]
        %v1807 = vld [vmem:[%s1804 + $0x8] sm:$0xf]
        %v1808 = vld [vmem:[%s1804 + $0xc] sm:$0xf]
        %v1809 = vld [vmem:[%s1804 + $0x10] sm:$0xf]
        %v1810 = vld [vmem:[%s1804 + $0x14] sm:$0xf]
        %v1811 = vld [vmem:[%s1804 + $0x18] sm:$0xf]
        %v1812 = vld [vmem:[%s1804 + $0x1c] sm:$0xf]
        %v1813 = vld [vmem:[%s1804 + $0x20] sm:$0xf]
        %v1814 = vld [vmem:[%s1804 + $0x24] sm:$0xf]
        %v1815 = vld [vmem:[%s1804 + $0x28] sm:$0xf]
        %v1816 = vld [vmem:[%s1804 + $0x2c] sm:$0xf]
        %v1817 = vld [vmem:[%s1804 + $0x30] sm:$0xf]
        %v1818 = vld [vmem:[%s1804 + $0x34] sm:$0xf]
        %v1819 = vld [vmem:[%s1804 + $0x38] sm:$0xf]
        %v1820 = vld [vmem:[%s1804 + $0x3c] sm:$0xf]
        %v1821 = vrot.slane %v1495, 2
        %v1839 = vunpack.c.l.b16 %v1805
        %v1840 = vunpack.c.l.b16 %v1806
        %v1841 = vunpack.c.l.b16 %v1807
        %v1842 = vunpack.c.l.b16 %v1808
        %v1843 = vunpack.c.l.b16 %v1809
        %v1844 = vunpack.c.l.b16 %v1810
        %v1845 = vunpack.c.l.b16 %v1811
        %v1846 = vunpack.c.l.b16 %v1812
        %v1847 = vunpack.c.l.b16 %v1813
        %v1848 = vunpack.c.l.b16 %v1814
        %v1849 = vunpack.c.l.b16 %v1815
        %v1850 = vunpack.c.l.b16 %v1816
        %v1851 = vunpack.c.l.b16 %v1817
        %v1852 = vunpack.c.l.b16 %v1818
        %v1853 = vunpack.c.l.b16 %v1819
        %v1854 = vunpack.c.l.b16 %v1820
        %v1855 = vpack.c.b16 %v1840, %v1839
        %v1856 = vpack.c.b16 %v1842, %v1841
        %v1857 = vpack.c.b16 %v1844, %v1843
        %v1858 = vpack.c.b16 %v1846, %v1845
        %v1859 = vpack.c.b16 %v1848, %v1847
        %v1860 = vpack.c.b16 %v1850, %v1849
        %v1861 = vpack.c.b16 %v1852, %v1851
        %v1862 = vpack.c.b16 %v1854, %v1853
        %1871 = vmatpush.bf16.msra.mxu0 %v1862
        %1872 = vmatpush.bf16.msra.mxu0 %v1861
        %1873 = vmatpush.bf16.msra.mxu0 %v1860
        %1874 = vmatpush.bf16.msra.mxu0 %v1859
        %1875 = vmatpush.bf16.msra.mxu0 %v1858
        %1876 = vmatpush.bf16.msra.mxu0 %v1857
        %1877 = vmatpush.bf16.msra.mxu0 %v1856
        %1878 = vmatpush.bf16.msra.mxu0 %v1855
        %1879 = vmatmul.bf16.gmra.mxu0 %v1821
        %v1880 = vpop.f32.mrf.mxu0
        %v1881 = vadd.f32 0.0, %v1880
        %v1882 = vpop.f32.mrf.mxu0
        %1883 = vdwg.mxu0
        %v1884 = vadd.f32 %v1803, %v1881
        %s1885 = scalar_lea.vmem [#allocation2], 896
        %v1886 = vld [vmem:[%s1885] sm:$0xf]
        %v1887 = vld [vmem:[%s1885 + $0x4] sm:$0xf]
        %v1888 = vld [vmem:[%s1885 + $0x8] sm:$0xf]
        %v1889 = vld [vmem:[%s1885 + $0xc] sm:$0xf]
        %v1890 = vld [vmem:[%s1885 + $0x10] sm:$0xf]
        %v1891 = vld [vmem:[%s1885 + $0x14] sm:$0xf]
        %v1892 = vld [vmem:[%s1885 + $0x18] sm:$0xf]
        %v1893 = vld [vmem:[%s1885 + $0x1c] sm:$0xf]
        %v1894 = vld [vmem:[%s1885 + $0x20] sm:$0xf]
        %v1895 = vld [vmem:[%s1885 + $0x24] sm:$0xf]
        %v1896 = vld [vmem:[%s1885 + $0x28] sm:$0xf]
        %v1897 = vld [vmem:[%s1885 + $0x2c] sm:$0xf]
        %v1898 = vld [vmem:[%s1885 + $0x30] sm:$0xf]
        %v1899 = vld [vmem:[%s1885 + $0x34] sm:$0xf]
        %v1900 = vld [vmem:[%s1885 + $0x38] sm:$0xf]
        %v1901 = vld [vmem:[%s1885 + $0x3c] sm:$0xf]
        %v1902 = vrot.slane %v1397, 3
        %v1920 = vunpack.c.l.b16 %v1886
        %v1921 = vunpack.c.l.b16 %v1887
        %v1922 = vunpack.c.l.b16 %v1888
        %v1923 = vunpack.c.l.b16 %v1889
        %v1924 = vunpack.c.l.b16 %v1890
        %v1925 = vunpack.c.l.b16 %v1891
        %v1926 = vunpack.c.l.b16 %v1892
        %v1927 = vunpack.c.l.b16 %v1893
        %v1928 = vunpack.c.l.b16 %v1894
        %v1929 = vunpack.c.l.b16 %v1895
        %v1930 = vunpack.c.l.b16 %v1896
        %v1931 = vunpack.c.l.b16 %v1897
        %v1932 = vunpack.c.l.b16 %v1898
        %v1933 = vunpack.c.l.b16 %v1899
        %v1934 = vunpack.c.l.b16 %v1900
        %v1935 = vunpack.c.l.b16 %v1901
        %v1936 = vpack.c.b16 %v1921, %v1920
        %v1937 = vpack.c.b16 %v1923, %v1922
        %v1938 = vpack.c.b16 %v1925, %v1924
        %v1939 = vpack.c.b16 %v1927, %v1926
        %v1940 = vpack.c.b16 %v1929, %v1928
        %v1941 = vpack.c.b16 %v1931, %v1930
        %v1942 = vpack.c.b16 %v1933, %v1932
        %v1943 = vpack.c.b16 %v1935, %v1934
        %1952 = vmatpush.bf16.msra.mxu0 %v1943
        %1953 = vmatpush.bf16.msra.mxu0 %v1942
        %1954 = vmatpush.bf16.msra.mxu0 %v1941
        %1955 = vmatpush.bf16.msra.mxu0 %v1940
        %1956 = vmatpush.bf16.msra.mxu0 %v1939
        %1957 = vmatpush.bf16.msra.mxu0 %v1938
        %1958 = vmatpush.bf16.msra.mxu0 %v1937
        %1959 = vmatpush.bf16.msra.mxu0 %v1936
        %1960 = vmatmul.bf16.gmra.mxu0 %v1902
        %v1961 = vpop.f32.mrf.mxu0
        %v1962 = vadd.f32 0.0, %v1961
        %v1963 = vpop.f32.mrf.mxu0
        %1964 = vdwg.mxu0
        %v1965 = vadd.f32 %v1884, %v1962
        %s1966 = scalar_lea.vmem [#allocation2], 960
        %v1967 = vld [vmem:[%s1966] sm:$0xf]
        %v1968 = vld [vmem:[%s1966 + $0x4] sm:$0xf]
        %v1969 = vld [vmem:[%s1966 + $0x8] sm:$0xf]
        %v1970 = vld [vmem:[%s1966 + $0xc] sm:$0xf]
        %v1971 = vld [vmem:[%s1966 + $0x10] sm:$0xf]
        %v1972 = vld [vmem:[%s1966 + $0x14] sm:$0xf]
        %v1973 = vld [vmem:[%s1966 + $0x18] sm:$0xf]
        %v1974 = vld [vmem:[%s1966 + $0x1c] sm:$0xf]
        %v1975 = vld [vmem:[%s1966 + $0x20] sm:$0xf]
        %v1976 = vld [vmem:[%s1966 + $0x24] sm:$0xf]
        %v1977 = vld [vmem:[%s1966 + $0x28] sm:$0xf]
        %v1978 = vld [vmem:[%s1966 + $0x2c] sm:$0xf]
        %v1979 = vld [vmem:[%s1966 + $0x30] sm:$0xf]
        %v1980 = vld [vmem:[%s1966 + $0x34] sm:$0xf]
        %v1981 = vld [vmem:[%s1966 + $0x38] sm:$0xf]
        %v1982 = vld [vmem:[%s1966 + $0x3c] sm:$0xf]
        %v1983 = vrot.slane %v1495, 3
        %v2001 = vunpack.c.l.b16 %v1967
        %v2002 = vunpack.c.l.b16 %v1968
        %v2003 = vunpack.c.l.b16 %v1969
        %v2004 = vunpack.c.l.b16 %v1970
        %v2005 = vunpack.c.l.b16 %v1971
        %v2006 = vunpack.c.l.b16 %v1972
        %v2007 = vunpack.c.l.b16 %v1973
        %v2008 = vunpack.c.l.b16 %v1974
        %v2009 = vunpack.c.l.b16 %v1975
        %v2010 = vunpack.c.l.b16 %v1976
        %v2011 = vunpack.c.l.b16 %v1977
        %v2012 = vunpack.c.l.b16 %v1978
        %v2013 = vunpack.c.l.b16 %v1979
        %v2014 = vunpack.c.l.b16 %v1980
        %v2015 = vunpack.c.l.b16 %v1981
        %v2016 = vunpack.c.l.b16 %v1982
        %v2017 = vpack.c.b16 %v2002, %v2001
        %v2018 = vpack.c.b16 %v2004, %v2003
        %v2019 = vpack.c.b16 %v2006, %v2005
        %v2020 = vpack.c.b16 %v2008, %v2007
        %v2021 = vpack.c.b16 %v2010, %v2009
        %v2022 = vpack.c.b16 %v2012, %v2011
        %v2023 = vpack.c.b16 %v2014, %v2013
        %v2024 = vpack.c.b16 %v2016, %v2015
        %2033 = vmatpush.bf16.msra.mxu0 %v2024
        %2034 = vmatpush.bf16.msra.mxu0 %v2023
        %2035 = vmatpush.bf16.msra.mxu0 %v2022
        %2036 = vmatpush.bf16.msra.mxu0 %v2021
        %2037 = vmatpush.bf16.msra.mxu0 %v2020
        %2038 = vmatpush.bf16.msra.mxu0 %v2019
        %2039 = vmatpush.bf16.msra.mxu0 %v2018
        %2040 = vmatpush.bf16.msra.mxu0 %v2017
        %2041 = vmatmul.bf16.gmra.mxu0 %v1983
        %v2042 = vpop.f32.mrf.mxu0
        %v2043 = vadd.f32 0.0, %v2042
        %v2044 = vpop.f32.mrf.mxu0
        %2045 = vdwg.mxu0
        %v2046 = vadd.f32 %v1965, %v2043
        %v2047 = vmax.f32 %v2046, 0.0
        %2048 = vst [vmem:[%s233] sm:$0x1] %v2047
        %s2049 = sand.u32 %s138, 1
        %s2050 = scalar_lea.sflag [#allocation4], %s2049
        %s2051 = sand.u32 %s138, 1
        %s2052 = scalar_lea.vmem [#allocation5], %s2051
        // Predicated region
        $region45: #{parsed_network_forward.1} parent=39 // pred_check
          %p2053 = pneg %p148
        $region46: #{parsed_network_forward.1} parent=39 // pred_check_branch
          %2055 = sbr.rel (%p2053) target = $region48
        $region47: #{parsed_network_forward.1} parent=39 // pred_region
          %2057 = vsyncadd %s2050, 0
          %s2058 = scalar_lea.hbm %s5, %s20
          %s2060 = sshll.u32 %s2052, 4
          %s2061 = int_to_ptr.vmem [resolvable:$true] %s2060
          %s2062 = sshll.u32 %s2058, 4
          %s2063 = int_to_ptr.hbm [resolvable:$true] %s2062
          %2065 = dma.vmem_to_hbm [thread:$0]  %s2061, 16, %s2063, %s2050
        $region48: #{parsed_network_forward.1} parent=39 // pred_fallthru
          _
      $region40: #{parsed_network_forward.1} parent=5 // pred_fallthru
        _
      %p2066 = scmp.le.s32.totalorder 2, %s15
      // Predicated region
      $region49: #{parsed_network_forward.1} parent=5 // pred_check
        %p2067 = pneg %p2066
      $region50: #{parsed_network_forward.1} parent=5 // pred_check_branch
        %2069 = sbr.rel (%p2067) target = $region52
      $region51: #{parsed_network_forward.1} parent=5 // pred_region
        %s2070 = ssub.s32 %s15, 2
        // Predicated region
        $region53: #{parsed_network_forward.1} parent=51 // pred_check
          %p2071 = pneg %p154
        $region54: #{parsed_network_forward.1} parent=51 // pred_check_branch
          %2073 = sbr.rel (%p2071) target = $region56
        $region55: #{parsed_network_forward.1} parent=51 // pred_region
          %s2074 = sand.u32 %s139, 1
          %s2075 = scalar_lea.sflag [#allocation4], %s2074
          %s2076 = sand.u32 %s139, 1
          %s2077 = scalar_lea.vmem [#allocation5], %s2076
          %2079 = dma.done %s2075, 16
        $region56: #{parsed_network_forward.1} parent=51 // pred_fallthru
          _
      $region52: #{parsed_network_forward.1} parent=5 // pred_fallthru
        _
    $region6: #{parsed_network_forward.1} parent=1 // loop_footer
      %s19 = sadd.s32 1, %s15
    $region7: #{parsed_network_forward.1} parent=1 // loop_footer_branch
      %14 = sbr.rel target = $region3
    $region8: #{parsed_network_forward.1} parent=1 // loop_exit
      _
    %2080 = vsyncpa [#allocation3], 1
    %s2081 = scalar_lea.sflag [#allocation3], 1
    %2082 = vsyncpa %s2081, 1
    %2083 = vsyncpa [#allocation4], 1
    %s2084 = scalar_lea.sflag [#allocation4], 1
    %2085 = vsyncpa %s2084, 1

</llo_original>
